<compile_context>
chip_gen: v6e
topology: v6e:2x2x1
jax: 0.10.0
libtpu: 0.0.40
codegen_flags: <defaults>
</compile_context>

<pallas_src>
import functools

import jax
import jax.numpy as jnp
from jax.experimental import pallas as pl
from jax.experimental.pallas import tpu as pltpu


def attention_kernel(x_ref, wqkv_ref, wo_ref, bo_ref, o_ref, *, heads,
                     dim_head):
    # x_ref: (n, dim) — one batch element (batch dim squeezed by the BlockSpec)
    n, dim = x_ref.shape
    inner = heads * dim_head
    cd = wqkv_ref.dtype                       # matmul operand dtype (f32/bf16)

    x = x_ref[...].astype(cd)                 # (n, dim)

    # One fused QKV projection; the attention scale is already folded into the
    # q columns by the wrapper.  f32 accumulation.
    qkv = jnp.dot(x, wqkv_ref[...],
                  preferred_element_type=jnp.float32)          # (n, 3*inner)

    def heads_major(t):                       # (n, inner) -> (heads, n, dh)
        return t.reshape(n, heads, dim_head).transpose(1, 0, 2)

    q = heads_major(qkv[:, 0 * inner:1 * inner])
    k = heads_major(qkv[:, 1 * inner:2 * inner])
    v = heads_major(qkv[:, 2 * inner:3 * inner])

    # Scores: contract the last dims of q and k (no explicit k transpose);
    # the head axis is the matmul batch axis.
    dots = jnp.einsum('hqd,hkd->hqk', q.astype(cd), k.astype(cd),
                      preferred_element_type=jnp.float32)      # (h, n, n)

    # Numerically-stable softmax, entirely in f32; divide rides the EUP slot.
    dots = dots - jnp.max(dots, axis=-1, keepdims=True)
    e = jnp.exp(dots)
    attn = e * pl.reciprocal(jnp.sum(e, axis=-1, keepdims=True), approx=True)

    out = jnp.einsum('hqk,hkd->hqd', attn.astype(cd), v.astype(cd),
                     preferred_element_type=jnp.float32)       # (h, n, dh)

    # Single dense output projection: one head->lane transpose, then
    # (n, inner) @ (inner, dim) with contraction depth K=inner.
    out2 = out.transpose(1, 0, 2).reshape(n, inner).astype(cd)
    res = jnp.dot(out2, wo_ref[...], preferred_element_type=jnp.float32)
    o_ref[...] = (res + bo_ref[...]).astype(o_ref.dtype)


def attention_pallas(x, w_qkv, w_out, b_out, *, heads, dim_head,
                     matmul_dtype=jnp.float32):
    """Fused attention forward; grid iterates over batch elements.

    matmul_dtype=jnp.bfloat16 halves HBM traffic and uses the native bf16 MXU
    path on all TPU generations; the softmax stays in f32 either way.
    """
    b, n, dim = x.shape
    inner = heads * dim_head
    assert w_qkv.shape == (dim, 3 * inner)
    assert w_out.shape == (inner, dim)
    scale = dim_head ** (-0.5)

    # ---- weight prep (XLA level, outside the kernel; effectively free) ----
    # Fold the attention scale into the q columns of the fused QKV weight.
    col_scale = jnp.concatenate(
        [jnp.full((1, inner), scale, dtype=w_qkv.dtype),
         jnp.ones((1, 2 * inner), dtype=w_qkv.dtype)], axis=1)
    wqkv = (w_qkv * col_scale).astype(matmul_dtype)
    wo = w_out.astype(matmul_dtype)
    bo = b_out.reshape(1, dim).astype(jnp.float32)
    xc = x.astype(matmul_dtype)

    mm_bytes = jnp.dtype(matmul_dtype).itemsize
    cost = pl.CostEstimate(
        flops=(2 * b * n * dim * 3 * inner            # fused qkv projection
               + 2 * b * heads * n * n * dim_head     # q @ k^T
               + 2 * b * heads * n * n * dim_head     # attn @ v
               + 2 * b * n * inner * dim),            # output projection
        transcendentals=b * heads * n * n,            # exp
        bytes_accessed=(b * n * dim * mm_bytes        # x in
                        + b * n * dim * x.dtype.itemsize   # out
                        + dim * 3 * inner * mm_bytes
                        + inner * dim * mm_bytes
                        + dim * 4))

    kernel = functools.partial(attention_kernel, heads=heads,
                               dim_head=dim_head)
    out = pl.pallas_call(
        kernel,
        out_shape=jax.ShapeDtypeStruct((b, n, dim), x.dtype),
        grid=(b,),
        in_specs=[
            # Per-batch x tile (moving index -> pipelined across batch).
            pl.BlockSpec((None, n, dim), lambda i: (i, 0, 0)),
            # Weights / bias: constant index_map -> stay resident in VMEM.
            pl.BlockSpec((dim, 3 * inner), lambda i: (0, 0)),
            pl.BlockSpec((inner, dim), lambda i: (0, 0)),
            pl.BlockSpec((1, dim), lambda i: (0, 0)),
        ],
        out_specs=pl.BlockSpec((None, n, dim), lambda i: (i, 0, 0)),
        compiler_params=pltpu.CompilerParams(
            dimension_semantics=("parallel",)),
        cost_estimate=cost,
    )(xc, wqkv, wo, bo)
    return out


def attention_ref(x, w_qkv, w_out, b_out, *, heads, dim_head):
    """Pure-JAX reference mirroring the PyTorch forward exactly."""
    b, n, dim = x.shape
    inner = heads * dim_head
    scale = dim_head ** (-0.5)
    qkv = x @ w_qkv                                           # (b, n, 3*inner)
    q, k, v = jnp.split(qkv, 3, axis=-1)

    def to_heads(t):  # 'b n (h d) -> b h n d'
        return t.reshape(b, n, heads, dim_head).transpose(0, 2, 1, 3)

    q, k, v = map(to_heads, (q, k, v))
    dots = jnp.einsum('bhid,bhjd->bhij', q, k) * scale
    attn = jax.nn.softmax(dots, axis=-1)
    out = jnp.einsum('bhij,bhjd->bhid', attn, v)
    out = out.transpose(0, 2, 1, 3).reshape(b, n, inner)      # 'b h n d->b n (hd)'
    return out @ w_out + b_out.reshape(1, dim)


if __name__ == "__main__":
    # Small shapes consistent with the module: dim=32, heads=4, dim_head=8.
    batch, seq, dim = 2, 8, 32
    heads, dim_head = 4, 8
    inner = heads * dim_head

    key = jax.random.PRNGKey(0)
    kx, kqkv, kw, kb = jax.random.split(key, 4)
    x = jax.random.normal(kx, (batch, seq, dim), dtype=jnp.float32)
    # Deterministic synthetic parameters (no checkpoint load).
    w_qkv = jax.random.normal(kqkv, (dim, 3 * inner), dtype=jnp.float32) * 0.05
    w_out = jax.random.normal(kw, (inner, dim), dtype=jnp.float32) * 0.05
    b_out = jax.random.normal(kb, (1, dim), dtype=jnp.float32) * 0.05

    ref = attention_ref(x, w_qkv, w_out, b_out, heads=heads, dim_head=dim_head)

    # f32 matmul-operand path (numerics-tight; approx reciprocal in softmax).
    out_f32 = attention_pallas(x, w_qkv, w_out, b_out, heads=heads,
                               dim_head=dim_head, matmul_dtype=jnp.float32)
    out_f32 = jax.block_until_ready(out_f32)
    assert out_f32.shape == (batch, seq, dim)
    assert jnp.allclose(out_f32, ref, atol=2e-3, rtol=2e-3), \
        "f32 path mismatch vs reference"

    # bf16 matmul-operand path (halved DMA bytes, native bf16 MXU; f32 softmax).
    out_bf16 = attention_pallas(x, w_qkv, w_out, b_out, heads=heads,
                                dim_head=dim_head, matmul_dtype=jnp.bfloat16)
    out_bf16 = jax.block_until_ready(out_bf16)
    assert jnp.allclose(out_bf16, ref, atol=5e-2, rtol=5e-2), \
        "bf16 path mismatch vs reference"

    print("KERNEL_OK")
</pallas_src>

<mosaic_0001>
module attributes {stable_mosaic.version = 11 : i64} {
  func.func @attention_kernel(%arg0: i32, %arg1: memref<1x8x32xf32, #tpu.memory_space<vmem>>, %arg2: memref<32x96xf32, #tpu.memory_space<vmem>>, %arg3: memref<32x32xf32, #tpu.memory_space<vmem>>, %arg4: memref<1x32xf32, #tpu.memory_space<vmem>>, %arg5: memref<1x8x32xf32, #tpu.memory_space<vmem>>) attributes {dimension_semantics = [#tpu.dimension_semantics<parallel>], iteration_bounds = array<i64: 2>, scalar_prefetch = 0 : i64, scratch_operands = 0 : i64, tpu.core_type = #tpu.core_type<tc>, window_params = [{transform_indices = @transform_0, window_bounds = array<i64: 1, 8, 32>}, {pipeline_mode = #tpu.pipeline_mode<synchronous>, transform_indices = @transform_1, window_bounds = array<i64: 32, 96>}, {pipeline_mode = #tpu.pipeline_mode<synchronous>, transform_indices = @transform_2, window_bounds = array<i64: 32, 32>}, {pipeline_mode = #tpu.pipeline_mode<synchronous>, transform_indices = @transform_3, window_bounds = array<i64: 1, 32>}, {transform_indices = @transform_4, window_bounds = array<i64: 1, 8, 32>}]} {
    %c0 = arith.constant 0 : index
    %c0_0 = arith.constant 0 : index
    %c0_1 = arith.constant 0 : index
    %0 = vector.load %arg1[%c0, %c0_0, %c0_1] : memref<1x8x32xf32, #tpu.memory_space<vmem>>, vector<1x8x32xf32>
    %1 = vector.shape_cast %0 : vector<1x8x32xf32> to vector<8x32xf32>
    %c0_2 = arith.constant 0 : index
    %c0_3 = arith.constant 0 : index
    %2 = vector.load %arg2[%c0_2, %c0_3] : memref<32x96xf32, #tpu.memory_space<vmem>>, vector<32x96xf32>
    %cst = arith.constant dense<0.000000e+00> : vector<8x96xf32>
    %3 = tpu.matmul %1, %2, %cst {dimension_numbers = #tpu.dot_dimension_numbers<[1], [0], [0], [1], [0, 0, 1, 1], [], []>} : vector<8x32xf32>, vector<32x96xf32>, vector<8x96xf32> -> vector<8x96xf32>
    %4 = vector.extract_strided_slice %3 {offsets = [0, 0], sizes = [8, 32], strides = [1, 1]} : vector<8x96xf32> to vector<8x32xf32>
    %5 = vector.shape_cast %4 : vector<8x32xf32> to vector<8x4x8xf32>
    %6 = tpu.transpose %5, [1, 0, 2] : vector<8x4x8xf32> -> vector<4x8x8xf32>
    %7 = vector.extract_strided_slice %3 {offsets = [0, 32], sizes = [8, 32], strides = [1, 1]} : vector<8x96xf32> to vector<8x32xf32>
    %8 = vector.shape_cast %7 : vector<8x32xf32> to vector<8x4x8xf32>
    %9 = tpu.transpose %8, [1, 0, 2] : vector<8x4x8xf32> -> vector<4x8x8xf32>
    %10 = vector.extract_strided_slice %3 {offsets = [0, 64], sizes = [8, 32], strides = [1, 1]} : vector<8x96xf32> to vector<8x32xf32>
    %11 = vector.shape_cast %10 : vector<8x32xf32> to vector<8x4x8xf32>
    %12 = tpu.transpose %11, [1, 0, 2] : vector<8x4x8xf32> -> vector<4x8x8xf32>
    "tpu.trace_start"() <{level = 10 : i32, message = "hqd,hkd->hqk"}> : () -> ()
    %cst_4 = arith.constant dense<0.000000e+00> : vector<4x8x8xf32>
    %13 = tpu.matmul %6, %9, %cst_4 {dimension_numbers = #tpu.dot_dimension_numbers<[2], [2], [1], [1], [0, 0, 0, 1, 1, 1], [0], [0]>} : vector<4x8x8xf32>, vector<4x8x8xf32>, vector<4x8x8xf32> -> vector<4x8x8xf32>
    "tpu.trace_stop"() : () -> ()
    %cst_5 = arith.constant dense<0xFF800000> : vector<4x8xf32>
    %14 = vector.multi_reduction <maximumf>, %13, %cst_5 [2] : vector<4x8x8xf32> to vector<4x8xf32>
    %15 = vector.shape_cast %14 : vector<4x8xf32> to vector<4x8x1xf32>
    %16 = vector.broadcast %15 : vector<4x8x1xf32> to vector<4x8x8xf32>
    %17 = arith.subf %13, %16 : vector<4x8x8xf32>
    %18 = math.exp %17 : vector<4x8x8xf32>
    %cst_6 = arith.constant dense<0.000000e+00> : vector<4x8xf32>
    %19 = vector.multi_reduction <add>, %18, %cst_6 [2] : vector<4x8x8xf32> to vector<4x8xf32>
    %20 = vector.shape_cast %19 : vector<4x8xf32> to vector<4x8x1xf32>
    %21 = tpu.reciprocal %20 {approx = true} : vector<4x8x1xf32> -> vector<4x8x1xf32>
    %22 = vector.broadcast %21 : vector<4x8x1xf32> to vector<4x8x8xf32>
    %23 = arith.mulf %18, %22 : vector<4x8x8xf32>
    "tpu.trace_start"() <{level = 10 : i32, message = "hqk,hkd->hqd"}> : () -> ()
    %cst_7 = arith.constant dense<0.000000e+00> : vector<4x8x8xf32>
    %24 = tpu.matmul %23, %12, %cst_7 {dimension_numbers = #tpu.dot_dimension_numbers<[2], [1], [1], [2], [0, 0, 0, 1, 1, 2], [0], [0]>} : vector<4x8x8xf32>, vector<4x8x8xf32>, vector<4x8x8xf32> -> vector<4x8x8xf32>
    "tpu.trace_stop"() : () -> ()
    %25 = tpu.transpose %24, [1, 0, 2] : vector<4x8x8xf32> -> vector<8x4x8xf32>
    %26 = vector.shape_cast %25 : vector<8x4x8xf32> to vector<8x32xf32>
    %c0_8 = arith.constant 0 : index
    %c0_9 = arith.constant 0 : index
    %27 = vector.load %arg3[%c0_8, %c0_9] : memref<32x32xf32, #tpu.memory_space<vmem>>, vector<32x32xf32>
    %cst_10 = arith.constant dense<0.000000e+00> : vector<8x32xf32>
    %28 = tpu.matmul %26, %27, %cst_10 {dimension_numbers = #tpu.dot_dimension_numbers<[1], [0], [0], [1], [0, 0, 1, 1], [], []>} : vector<8x32xf32>, vector<32x32xf32>, vector<8x32xf32> -> vector<8x32xf32>
    %c0_11 = arith.constant 0 : index
    %c0_12 = arith.constant 0 : index
    %29 = vector.load %arg4[%c0_11, %c0_12] : memref<1x32xf32, #tpu.memory_space<vmem>>, vector<1x32xf32>
    %30 = vector.broadcast %29 : vector<1x32xf32> to vector<8x32xf32>
    %31 = arith.addf %28, %30 : vector<8x32xf32>
    %c0_13 = arith.constant 0 : index
    %c0_14 = arith.constant 0 : index
    %c0_15 = arith.constant 0 : index
    %32 = vector.load %arg5[%c0_13, %c0_14, %c0_15] : memref<1x8x32xf32, #tpu.memory_space<vmem>>, vector<1x8x32xf32>
    %33 = vector.shape_cast %32 : vector<1x8x32xf32> to vector<8x32xf32>
    %34 = vector.shape_cast %31 : vector<8x32xf32> to vector<1x8x32xf32>
    tpu.vector_store %arg5[%c0_13, %c0_14, %c0_15], %34 {strides = array<i32>} : memref<1x8x32xf32, #tpu.memory_space<vmem>>, vector<1x8x32xf32>,
    return
  }
  func.func @transform_0(%arg0: i32) -> (i32, i32, i32) {
    %c0_i32 = arith.constant 0 : i32
    %c0_i32_0 = arith.constant 0 : i32
    %c0_i32_1 = arith.constant 0 : i32
    return %arg0, %c0_i32, %c0_i32_0 : i32, i32, i32
  }
  func.func @transform_1(%arg0: i32) -> (i32, i32) {
    %c0_i32 = arith.constant 0 : i32
    %c0_i32_0 = arith.constant 0 : i32
    %c0_i32_1 = arith.constant 0 : i32
    return %c0_i32, %c0_i32_0 : i32, i32
  }
  func.func @transform_2(%arg0: i32) -> (i32, i32) {
    %c0_i32 = arith.constant 0 : i32
    %c0_i32_0 = arith.constant 0 : i32
    %c0_i32_1 = arith.constant 0 : i32
    return %c0_i32, %c0_i32_0 : i32, i32
  }
  func.func @transform_3(%arg0: i32) -> (i32, i32) {
    %c0_i32 = arith.constant 0 : i32
    %c0_i32_0 = arith.constant 0 : i32
    %c0_i32_1 = arith.constant 0 : i32
    return %c0_i32, %c0_i32_0 : i32, i32
  }
  func.func @transform_4(%arg0: i32) -> (i32, i32, i32) {
    %c0_i32 = arith.constant 0 : i32
    %c0_i32_0 = arith.constant 0 : i32
    %c0_i32_1 = arith.constant 0 : i32
    return %arg0, %c0_i32, %c0_i32_0 : i32, i32, i32
  }
}

</mosaic_0001>

<llo_original>
// kernel: tpu_custom_call.1
$region0: #{tpu_custom_call.1}
  #allocation0 [shape = 'u32[]', space=smem, size = 0x4, offset = 0x4, fixed_abs, tag = 'smem constant byte address 0x4 - core index']
  #allocation1 [shape = 'u32[144,128]{1,0:T(1,128)}', space=vmem, size = 0x12000, scoped, tag = 'internal scratch']
  %s0 = inlined_call_operand.hbm [shape: f32[2,8,32], index: 0, kind: input, shape index: {}]
  %s1 = inlined_call_operand.hbm [shape: f32[32,96], index: 1, kind: input, shape index: {}]
  %s2 = inlined_call_operand.hbm [shape: f32[32,32], index: 2, kind: input, shape index: {}]
  %s3 = inlined_call_operand.vmem [shape: f32[1,32], index: 3, kind: input, shape index: {}]
  %s4 = inlined_call_operand.hbm [shape: f32[2,8,32], index: 4, kind: output, shape index: {}]
  %s5 = sld [smem:[#allocation0]]
  $region61: #{tpu_custom_call.1} parent=0
    _
  %s7 = ssub.s32 1, %s5
  %s8 = scalar_select 0, %s7, %s5
  $region1: #{tpu_custom_call.1} parent=0
    #allocation2 [shape = 'u8[8192]{0}', space=vmem, size = 0x2000, scoped, tag = 'input window, operand 0']
    #allocation3 [shape = 's32[2]{0}', space=sflag, size = 0x8, scoped, tag = 'scoped memory for tpu_custom_call.1']
    #allocation4 [shape = 's32[2]{0}', space=sflag, size = 0x8, scoped, tag = 'scoped memory for tpu_custom_call.1']
    #allocation5 [shape = 'u8[16384]{0}', space=vmem, size = 0x4000, scoped, tag = 'input window, operand 1, single buffered']
    #allocation6 [shape = 's32[1]{0}', space=sflag, size = 0x4, scoped, tag = 'scoped memory for tpu_custom_call.1']
    #allocation7 [shape = 'u8[16384]{0}', space=vmem, size = 0x4000, scoped, tag = 'input window, operand 2, single buffered']
    #allocation8 [shape = 'u8[8192]{0}', space=vmem, size = 0x2000, scoped, tag = 'output window, operand 0']
    %9 = vsyncpa [#allocation3], 0
    %s10 = scalar_lea.sflag [#allocation3], 1
    %11 = vsyncpa %s10, 0
    %12 = vsyncpa [#allocation6], 0
    %13 = vsyncpa [#allocation4], 0
    %s14 = scalar_lea.sflag [#allocation4], 1
    %15 = vsyncpa %s14, 0
    loop: start=0, step=1, limit=4
    $region2: #{tpu_custom_call.1} parent=1 // loop_pre_header
      _
    $region3: #{tpu_custom_call.1} parent=1 // loop_header
      %s17 = sphi 0, %s21
      %p18 = scmp.ge.s32.totalorder %s17, 4
      %s27 = sphi 0, %s29
      %s30 = sphi 0, %s27
      %s31 = sphi 0, %s30
      %s47 = sphi 0, %s31
      %s51 = sphi 0, %s51
      %s53 = sphi 0, %s51
      %s54 = sphi 0, %s53
      %s68 = sphi 0, %s54
      %s72 = sphi 0, %s72
      %s74 = sphi 0, %s72
      %s75 = sphi 0, %s74
      %s89 = sphi 0, %s75
      %s93 = sphi 0, %s93
      %s95 = sphi 0, %s93
      %s96 = sphi 0, %s95
      %s110 = sphi 0, %s96
      %s116 = sphi 0, %s118
      %s119 = sphi 0, %s116
      %s120 = sphi 0, %s119
      %s136 = sphi 0, %s120
    $region4: #{tpu_custom_call.1} parent=1 // loop_header_branch
      %20 = sbr.rel (%p18) target = $region8
    $region5: #{tpu_custom_call.1} parent=1 // loop_body
      %s22 = ssub.s32 %s17, 1
      %s23 = ssub.s32 %s17, 2
      %s24 = sadd.s32 %s17, 1
      %s25 = ssub.s32 %s17, %s24
      %p26 = scmp.eq.s32.totalorder %s25, 0
      %s28 = sadd.s32 %s27, 1
      %s29 = scalar_select %p26, %s27, %s28
      %p32 = pneg %p26
      %p33 = scmp.eq.s32.totalorder %s17, 1
      %p34 = por %p32, %p33
      %p35 = scmp.ne.s32.totalorder %s27, %s30
      %p36 = scmp.eq.s32.totalorder %s17, 0
      %p37 = por %p35, %p36
      %p38 = scmp.ne.s32.totalorder %s27, %s30
      %p39 = scmp.eq.s32.totalorder %s22, 1
      %p40 = por %p38, %p39
      %p41 = scmp.ne.s32.totalorder %s30, %s31
      %p42 = scmp.eq.s32.totalorder %s22, 0
      %p43 = por %p41, %p42
      %p44 = scmp.ne.s32.totalorder %s30, %s31
      %p45 = scmp.eq.s32.totalorder %s23, 1
      %p46 = por %p44, %p45
      %p48 = scmp.ne.s32.totalorder %s31, %s47
      %p49 = scmp.eq.s32.totalorder %s23, 0
      %p50 = por %p48, %p49
      %s52 = sadd.s32 %s51, 1
      %p55 = scmp.eq.s32.totalorder %s17, 1
      %p56 = scmp.ne.s32.totalorder %s51, %s53
      %p57 = scmp.eq.s32.totalorder %s17, 0
      %p58 = por %p56, %p57
      %p59 = scmp.ne.s32.totalorder %s51, %s53
      %p60 = scmp.eq.s32.totalorder %s22, 1
      %p61 = por %p59, %p60
      %p62 = scmp.ne.s32.totalorder %s53, %s54
      %p63 = scmp.eq.s32.totalorder %s22, 0
      %p64 = por %p62, %p63
      %p65 = scmp.ne.s32.totalorder %s53, %s54
      %p66 = scmp.eq.s32.totalorder %s23, 1
      %p67 = por %p65, %p66
      %p69 = scmp.ne.s32.totalorder %s54, %s68
      %p70 = scmp.eq.s32.totalorder %s23, 0
      %p71 = por %p69, %p70
      %s73 = sadd.s32 %s72, 1
      %p76 = scmp.eq.s32.totalorder %s17, 1
      %p77 = scmp.ne.s32.totalorder %s72, %s74
      %p78 = scmp.eq.s32.totalorder %s17, 0
      %p79 = por %p77, %p78
      %p80 = scmp.ne.s32.totalorder %s72, %s74
      %p81 = scmp.eq.s32.totalorder %s22, 1
      %p82 = por %p80, %p81
      %p83 = scmp.ne.s32.totalorder %s74, %s75
      %p84 = scmp.eq.s32.totalorder %s22, 0
      %p85 = por %p83, %p84
      %p86 = scmp.ne.s32.totalorder %s74, %s75
      %p87 = scmp.eq.s32.totalorder %s23, 1
      %p88 = por %p86, %p87
      %p90 = scmp.ne.s32.totalorder %s75, %s89
      %p91 = scmp.eq.s32.totalorder %s23, 0
      %p92 = por %p90, %p91
      %s94 = sadd.s32 %s93, 1
      %p97 = scmp.eq.s32.totalorder %s17, 1
      %p98 = scmp.ne.s32.totalorder %s93, %s95
      %p99 = scmp.eq.s32.totalorder %s17, 0
      %p100 = por %p98, %p99
      %p101 = scmp.ne.s32.totalorder %s93, %s95
      %p102 = scmp.eq.s32.totalorder %s22, 1
      %p103 = por %p101, %p102
      %p104 = scmp.ne.s32.totalorder %s95, %s96
      %p105 = scmp.eq.s32.totalorder %s22, 0
      %p106 = por %p104, %p105
      %p107 = scmp.ne.s32.totalorder %s95, %s96
      %p108 = scmp.eq.s32.totalorder %s23, 1
      %p109 = por %p107, %p108
      %p111 = scmp.ne.s32.totalorder %s96, %s110
      %p112 = scmp.eq.s32.totalorder %s23, 0
      %p113 = por %p111, %p112
      %s114 = ssub.s32 %s17, %s24
      %p115 = scmp.eq.s32.totalorder %s114, 0
      %s117 = sadd.s32 %s116, 1
      %s118 = scalar_select %p115, %s116, %s117
      %p121 = pneg %p115
      %p122 = scmp.eq.s32.totalorder %s17, 1
      %p123 = por %p121, %p122
      %p124 = scmp.ne.s32.totalorder %s116, %s119
      %p125 = scmp.eq.s32.totalorder %s17, 0
      %p126 = por %p124, %p125
      %p127 = scmp.ne.s32.totalorder %s116, %s119
      %p128 = scmp.eq.s32.totalorder %s22, 1
      %p129 = por %p127, %p128
      %p130 = scmp.ne.s32.totalorder %s119, %s120
      %p131 = scmp.eq.s32.totalorder %s22, 0
      %p132 = por %p130, %p131
      %p133 = scmp.ne.s32.totalorder %s119, %s120
      %p134 = scmp.eq.s32.totalorder %s23, 1
      %p135 = por %p133, %p134
      %p137 = scmp.ne.s32.totalorder %s120, %s136
      %p138 = scmp.eq.s32.totalorder %s23, 0
      %p139 = por %p137, %p138
      %p140 = scmp.le.s32.totalorder 1, %s17
      %p141 = scmp.lt.s32.totalorder %s17, 3
      %p142 = pnand %p140, %p141
      %p143 = pneg %p142
      // Predicated region
      $region9: #{tpu_custom_call.1} parent=5 // pred_check
        _
      $region10: #{tpu_custom_call.1} parent=5 // pred_check_branch
        %145 = sbr.rel (%p142) target = $region12
      $region11: #{tpu_custom_call.1} parent=5 // pred_region
        %s146 = ssub.s32 %s17, 1
        // Predicated region
        $region13: #{tpu_custom_call.1} parent=11 // pred_check
          %p147 = pneg %p64
        $region14: #{tpu_custom_call.1} parent=11 // pred_check_branch
          %149 = sbr.rel (%p147) target = $region16
        $region15: #{tpu_custom_call.1} parent=11 // pred_region
          %s151 = ssub.s32 512, 512
          %152 = vsyncadd [#allocation6], %s151
          %s153 = sshll.u32 [#allocation5], 4
          %s154 = int_to_ptr.vmem [resolvable:$true] %s153
          %159 = dma.hbm_to_vmem [thread:$0]  %s1, 512, %s154, [#allocation6], 128, 128, 8
        $region16: #{tpu_custom_call.1} parent=11 // pred_fallthru
          _
        // Predicated region
        $region17: #{tpu_custom_call.1} parent=11 // pred_check
          %p160 = pneg %p85
        $region18: #{tpu_custom_call.1} parent=11 // pred_check_branch
          %162 = sbr.rel (%p160) target = $region20
        $region19: #{tpu_custom_call.1} parent=11 // pred_region
          %s164 = ssub.s32 512, 512
          %165 = vsyncadd [#allocation6], %s164
          %s166 = sshll.u32 [#allocation7], 4
          %s167 = int_to_ptr.vmem [resolvable:$true] %s166
          %172 = dma.hbm_to_vmem [thread:$0]  %s2, 512, %s167, [#allocation6], 128, 128, 8
        $region20: #{tpu_custom_call.1} parent=11 // pred_fallthru
          _
        // Predicated region
        $region21: #{tpu_custom_call.1} parent=11 // pred_check
          %p173 = pneg %p106
        $region22: #{tpu_custom_call.1} parent=11 // pred_check_branch
          %175 = sbr.rel (%p173) target = $region24
        $region23: #{tpu_custom_call.1} parent=11 // pred_region
          _
        $region24: #{tpu_custom_call.1} parent=11 // pred_fallthru
          _
      $region12: #{tpu_custom_call.1} parent=5 // pred_fallthru
        _
      %p176 = scmp.lt.s32.totalorder %s17, 2
      // Predicated region
      $region25: #{tpu_custom_call.1} parent=5 // pred_check
        %p177 = pneg %p176
      $region26: #{tpu_custom_call.1} parent=5 // pred_check_branch
        %179 = sbr.rel (%p177) target = $region28
      $region27: #{tpu_custom_call.1} parent=5 // pred_region
        // Predicated region
        $region29: #{tpu_custom_call.1} parent=27 // pred_check
          %p180 = pneg %p37
        $region30: #{tpu_custom_call.1} parent=27 // pred_check_branch
          %182 = sbr.rel (%p180) target = $region32
        $region31: #{tpu_custom_call.1} parent=27 // pred_region
          %s183 = sand.u32 %s27, 1
          %s184 = scalar_lea.sflag [#allocation3], %s183
          %s185 = sand.u32 %s27, 1
          %s186 = smul.addr %s185, 8
          %s187 = scalar_lea.vmem [#allocation2], %s186
          %s189 = ssub.s32 128, 128
          %190 = vsyncadd %s184, %s189
          %s191 = smul.addr %s17, 128
          %s192 = scalar_lea.hbm %s0, %s191
          %s194 = sshll.u32 %s187, 4
          %s195 = int_to_ptr.vmem [resolvable:$true] %s194
          %197 = dma.hbm_to_vmem [thread:$0]  %s192, 128, %s195, %s184
        $region32: #{tpu_custom_call.1} parent=27 // pred_fallthru
          _
      $region28: #{tpu_custom_call.1} parent=5 // pred_fallthru
        _
      %p198 = scmp.le.s32.totalorder 1, %s17
      %p199 = scmp.lt.s32.totalorder %s17, 3
      %p200 = pnand %p198, %p199
      %p201 = pneg %p200
      // Predicated region
      $region33: #{tpu_custom_call.1} parent=5 // pred_check
        _
      $region34: #{tpu_custom_call.1} parent=5 // pred_check_branch
        %203 = sbr.rel (%p200) target = $region36
      $region35: #{tpu_custom_call.1} parent=5 // pred_region
        %s204 = ssub.s32 %s17, 1
        %s205 = sand.u32 %s30, 1
        %s206 = scalar_lea.sflag [#allocation3], %s205
        %s207 = sand.u32 %s30, 1
        %s208 = smul.addr %s207, 8
        %s209 = scalar_lea.vmem [#allocation2], %s208
        // Predicated region
        $region37: #{tpu_custom_call.1} parent=35 // pred_check
          %p210 = pneg %p43
        $region38: #{tpu_custom_call.1} parent=35 // pred_check_branch
          %212 = sbr.rel (%p210) target = $region40
        $region39: #{tpu_custom_call.1} parent=35 // pred_region
          %213 = dma.done %s206, 128
        $region40: #{tpu_custom_call.1} parent=35 // pred_fallthru
          _
        // Predicated region
        $region41: #{tpu_custom_call.1} parent=35 // pred_check
          %p214 = pneg %p64
        $region42: #{tpu_custom_call.1} parent=35 // pred_check_branch
          %216 = sbr.rel (%p214) target = $region44
        $region43: #{tpu_custom_call.1} parent=35 // pred_region
          %217 = dma.done [#allocation6], 512
        $region44: #{tpu_custom_call.1} parent=35 // pred_fallthru
          _
        // Predicated region
        $region45: #{tpu_custom_call.1} parent=35 // pred_check
          %p218 = pneg %p85
        $region46: #{tpu_custom_call.1} parent=35 // pred_check_branch
          %220 = sbr.rel (%p218) target = $region48
        $region47: #{tpu_custom_call.1} parent=35 // pred_region
          %221 = dma.done [#allocation6], 512
        $region48: #{tpu_custom_call.1} parent=35 // pred_fallthru
          _
        %s222 = sand.u32 %s30, 1
        %s223 = scalar_lea.sflag [#allocation3], %s222
        %s224 = sand.u32 %s30, 1
        %s225 = smul.addr %s224, 8
        %s226 = scalar_lea.vmem [#allocation2], %s225
        %p227 = pneg %p43
        %p228 = pneg %p40
        %p229 = pneg %p64
        %p230 = pneg %p61
        %p231 = pneg %p85
        %p232 = pneg %p82
        %p233 = pneg %p106
        %p234 = pneg %p103
        %p235 = pneg %p132
        %p236 = pneg %p129
        %s237 = sand.u32 %s119, 1
        %s238 = scalar_lea.sflag [#allocation4], %s237
        %s239 = sand.u32 %s119, 1
        %s240 = smul.addr %s239, 8
        %s241 = scalar_lea.vmem [#allocation8], %s240
        %v242 = vld [vmem:[%s209] sm:$0xff]
        %v243 = vld [vmem:[#allocation5] sm:$0xff]
        %v244 = vld [vmem:[#allocation5 + $0x8] sm:$0xff]
        %v245 = vld [vmem:[#allocation5 + $0x10] sm:$0xff]
        %v246 = vld [vmem:[#allocation5 + $0x18] sm:$0xff]
        %vm247 = vcmask 261120
        %v249 = vsel %vm247, %v242, 0
        %251 = vmatprep.subr.mxu0 0.0
        %252 = vmatpush1.msra.mxu0 0.0
        %253 = vmatprep.subr.mxu0 0.0
        %254 = vmatpush1.msra.mxu0 0.0
        %255 = vmatprep.subr.mxu0 0.0
        %256 = vmatpush1.msra.mxu0 0.0
        %257 = vmatprep.subr.mxu0 0.0
        %258 = vmatpush1.msra.mxu0 0.0
        %259 = vmatprep.subr.mxu0 0.0
        %260 = vmatpush1.msra.mxu0 0.0
        %261 = vmatprep.subr.mxu0 0.0
        %262 = vmatpush1.msra.mxu0 0.0
        %263 = vmatprep.subr.mxu0 0.0
        %264 = vmatpush1.msra.mxu0 0.0
        %265 = vmatprep.subr.mxu0 0.0
        %266 = vmatpush1.msra.mxu0 0.0
        %267 = vmatprep.subr.mxu0 0.0
        %268 = vmatpush1.msra.mxu0 0.0
        %269 = vmatprep.subr.mxu0 0.0
        %270 = vmatpush1.msra.mxu0 0.0
        %271 = vmatprep.subr.mxu0 0.0
        %272 = vmatpush1.msra.mxu0 0.0
        %273 = vmatprep.subr.mxu0 0.0
        %274 = vmatpush1.msra.mxu0 0.0
        %275 = vmatprep.subr.mxu0 0.0
        %276 = vmatpush1.msra.mxu0 %v246
        %277 = vmatprep.subr.mxu0 0.0
        %278 = vmatpush1.msra.mxu0 %v245
        %279 = vmatprep.subr.mxu0 0.0
        %280 = vmatpush1.msra.mxu0 %v244
        %281 = vmatprep.subr.mxu0 0.0
        %282 = vmatpush1.msra.mxu0 %v243
        %283 = vmatprep.subr.mxu0 0.0
        %284 = vmatpush2.msra.mxu0 0.0
        %285 = vmatprep.subr.mxu0 0.0
        %286 = vmatpush2.msra.mxu0 0.0
        %287 = vmatprep.subr.mxu0 0.0
        %288 = vmatpush2.msra.mxu0 0.0
        %289 = vmatprep.subr.mxu0 0.0
        %290 = vmatpush2.msra.mxu0 0.0
        %291 = vmatprep.subr.mxu0 0.0
        %292 = vmatpush2.msra.mxu0 0.0
        %293 = vmatprep.subr.mxu0 0.0
        %294 = vmatpush2.msra.mxu0 0.0
        %295 = vmatprep.subr.mxu0 0.0
        %296 = vmatpush2.msra.mxu0 0.0
        %297 = vmatprep.subr.mxu0 0.0
        %298 = vmatpush2.msra.mxu0 0.0
        %299 = vmatprep.subr.mxu0 0.0
        %300 = vmatpush2.msra.mxu0 0.0
        %301 = vmatprep.subr.mxu0 0.0
        %302 = vmatpush2.msra.mxu0 0.0
        %303 = vmatprep.subr.mxu0 0.0
        %304 = vmatpush2.msra.mxu0 0.0
        %305 = vmatprep.subr.mxu0 0.0
        %306 = vmatpush2.msra.mxu0 0.0
        %307 = vmatprep.subr.mxu0 0.0
        %308 = vmatpush2.msra.mxu0 0.0
        %309 = vmatprep.subr.mxu0 0.0
        %310 = vmatpush2.msra.mxu0 0.0
        %311 = vmatprep.subr.mxu0 0.0
        %312 = vmatpush2.msra.mxu0 0.0
        %313 = vmatprep.subr.mxu0 0.0
        %314 = vmatpush2.msra.mxu0 0.0
        %315 = vmatprep.mubr.f32.mxu0 0.0
        %316 = vmatmul.mubr.f32.gmra.mxu0 %v249
        %v317 = vpop.f32.mrf.mxu0
        %v318 = vadd.f32 0.0, %v317
        %v319 = vpop.f32.mrf.mxu0
        %320 = vdwg.mxu0
        %322 = vrot.lane.b32.xlu0 %v318, 120
        %v323 = vpop.permute.xlu0 %322
        %325 = vrot.lane.b32.xlu0 %v318, 112
        %v326 = vpop.permute.xlu0 %325
        %328 = vrot.lane.b32.xlu0 %v318, 104
        %v329 = vpop.permute.xlu0 %328
        %v331 = vcombine.low %v318, %v326
        %v332 = vcombine.high %v318, %v326
        %v334 = vunpack.c.l.s4 1983009808
        %v335 = vunpack.c.0.s8 %v334
        %v336 = vlaneseq
        %v337 = vshrl.u32 %v336, 7
        %v338 = vsub.s32 %v335, %v337
        %v339 = vrot.slane %v331, %v338
        %v341 = vunpack.c.l.s4 1983009808
        %v342 = vunpack.c.0.s8 %v341
        %v343 = vlaneseq
        %v344 = vshrl.u32 %v343, 7
        %v345 = vsub.s32 %v342, %v344
        %v346 = vrot.slane %v332, %v345
        %v347 = vcombine.low %v323, %v329
        %v348 = vcombine.high %v323, %v329
        %v350 = vunpack.c.l.s4 1983009808
        %v351 = vunpack.c.0.s8 %v350
        %v352 = vlaneseq
        %v353 = vshrl.u32 %v352, 7
        %v354 = vsub.s32 %v351, %v353
        %v355 = vrot.slane %v347, %v354
        %v357 = vunpack.c.l.s4 1983009808
        %v358 = vunpack.c.0.s8 %v357
        %v359 = vlaneseq
        %v360 = vshrl.u32 %v359, 7
        %v361 = vsub.s32 %v358, %v360
        %v362 = vrot.slane %v348, %v361
        %v363 = vcombine.low %v339, %v355
        %v364 = vcombine.high %v339, %v355
        %v366 = vunpack.c.l.s4 1934713408
        %v367 = vunpack.c.0.s8 %v366
        %v368 = vlaneseq
        %v369 = vshrl.u32 %v368, 7
        %v370 = vsub.s32 %v367, %v369
        %v371 = vrot.slane %v363, %v370
        %v373 = vunpack.c.l.s4 1934713408
        %v374 = vunpack.c.0.s8 %v373
        %v375 = vlaneseq
        %v376 = vshrl.u32 %v375, 7
        %v377 = vsub.s32 %v374, %v376
        %v378 = vrot.slane %v364, %v377
        %v379 = vcombine.low %v346, %v362
        %v380 = vcombine.high %v346, %v362
        %v382 = vunpack.c.l.s4 1934713408
        %v383 = vunpack.c.0.s8 %v382
        %v384 = vlaneseq
        %v385 = vshrl.u32 %v384, 7
        %v386 = vsub.s32 %v383, %v385
        %v387 = vrot.slane %v379, %v386
        %v389 = vunpack.c.l.s4 1934713408
        %v390 = vunpack.c.0.s8 %v389
        %v391 = vlaneseq
        %v392 = vshrl.u32 %v391, 7
        %v393 = vsub.s32 %v390, %v392
        %v394 = vrot.slane %v380, %v393
        %v395 = vcombine.high %v371, 0.0
        %v396 = vcombine.high %v378, 0.0
        %v397 = vcombine.high %v387, 0.0
        %v398 = vcombine.high %v394, 0.0
        %v399 = vcombine.low %v371, %v378
        %v401 = vunpack.c.l.s4 1983009808
        %v402 = vunpack.c.0.s8 %v401
        %v403 = vlaneseq
        %v404 = vshrl.u32 %v403, 7
        %v405 = vsub.s32 %v402, %v404
        %v406 = vrot.slane %v399, %v405
        %v407 = vcombine.low %v395, %v396
        %v409 = vunpack.c.l.s4 1983009808
        %v410 = vunpack.c.0.s8 %v409
        %v411 = vlaneseq
        %v412 = vshrl.u32 %v411, 7
        %v413 = vsub.s32 %v410, %v412
        %v414 = vrot.slane %v407, %v413
        %v415 = vcombine.low %v387, %v394
        %v417 = vunpack.c.l.s4 1983009808
        %v418 = vunpack.c.0.s8 %v417
        %v419 = vlaneseq
        %v420 = vshrl.u32 %v419, 7
        %v421 = vsub.s32 %v418, %v420
        %v422 = vrot.slane %v415, %v421
        %v423 = vcombine.low %v397, %v398
        %v425 = vunpack.c.l.s4 1983009808
        %v426 = vunpack.c.0.s8 %v425
        %v427 = vlaneseq
        %v428 = vshrl.u32 %v427, 7
        %v429 = vsub.s32 %v426, %v428
        %v430 = vrot.slane %v423, %v429
        %v431 = vcombine.low %v406, %v414
        %v432 = vcombine.high %v406, %v414
        %v434 = vunpack.c.l.s4 1934713408
        %v435 = vunpack.c.0.s8 %v434
        %v436 = vlaneseq
        %v437 = vshrl.u32 %v436, 7
        %v438 = vsub.s32 %v435, %v437
        %v439 = vrot.slane %v431, %v438
        %v441 = vunpack.c.l.s4 1934713408
        %v442 = vunpack.c.0.s8 %v441
        %v443 = vlaneseq
        %v444 = vshrl.u32 %v443, 7
        %v445 = vsub.s32 %v442, %v444
        %v446 = vrot.slane %v432, %v445
        %v447 = vcombine.low %v422, %v430
        %v448 = vcombine.high %v422, %v430
        %v450 = vunpack.c.l.s4 1934713408
        %v451 = vunpack.c.0.s8 %v450
        %v452 = vlaneseq
        %v453 = vshrl.u32 %v452, 7
        %v454 = vsub.s32 %v451, %v453
        %v455 = vrot.slane %v447, %v454
        %v457 = vunpack.c.l.s4 1934713408
        %v458 = vunpack.c.0.s8 %v457
        %v459 = vlaneseq
        %v460 = vshrl.u32 %v459, 7
        %v461 = vsub.s32 %v458, %v460
        %v462 = vrot.slane %v448, %v461
        %v463 = vcombine.low %v439, %v455
        %v464 = vcombine.high %v439, %v455
        %v465 = vcombine.low %v446, %v462
        %v466 = vcombine.high %v446, %v462
        %467 = vrot.lane.b32.xlu0 %v318, 96
        %v468 = vpop.permute.xlu0 %467
        %469 = vrot.lane.b32.xlu0 %v323, 96
        %v470 = vpop.permute.xlu0 %469
        %471 = vrot.lane.b32.xlu0 %v326, 96
        %v472 = vpop.permute.xlu0 %471
        %473 = vrot.lane.b32.xlu0 %v329, 96
        %v474 = vpop.permute.xlu0 %473
        %v479 = vcombine.low %v468, %v472
        %v480 = vcombine.high %v468, %v472
        %v482 = vunpack.c.l.s4 1983009808
        %v483 = vunpack.c.0.s8 %v482
        %v484 = vlaneseq
        %v485 = vshrl.u32 %v484, 7
        %v486 = vsub.s32 %v483, %v485
        %v487 = vrot.slane %v479, %v486
        %v489 = vunpack.c.l.s4 1983009808
        %v490 = vunpack.c.0.s8 %v489
        %v491 = vlaneseq
        %v492 = vshrl.u32 %v491, 7
        %v493 = vsub.s32 %v490, %v492
        %v494 = vrot.slane %v480, %v493
        %v495 = vcombine.low %v470, %v474
        %v496 = vcombine.high %v470, %v474
        %v498 = vunpack.c.l.s4 1983009808
        %v499 = vunpack.c.0.s8 %v498
        %v500 = vlaneseq
        %v501 = vshrl.u32 %v500, 7
        %v502 = vsub.s32 %v499, %v501
        %v503 = vrot.slane %v495, %v502
        %v505 = vunpack.c.l.s4 1983009808
        %v506 = vunpack.c.0.s8 %v505
        %v507 = vlaneseq
        %v508 = vshrl.u32 %v507, 7
        %v509 = vsub.s32 %v506, %v508
        %v510 = vrot.slane %v496, %v509
        %v511 = vcombine.low %v487, %v503
        %v512 = vcombine.high %v487, %v503
        %v514 = vunpack.c.l.s4 1934713408
        %v515 = vunpack.c.0.s8 %v514
        %v516 = vlaneseq
        %v517 = vshrl.u32 %v516, 7
        %v518 = vsub.s32 %v515, %v517
        %v519 = vrot.slane %v511, %v518
        %v521 = vunpack.c.l.s4 1934713408
        %v522 = vunpack.c.0.s8 %v521
        %v523 = vlaneseq
        %v524 = vshrl.u32 %v523, 7
        %v525 = vsub.s32 %v522, %v524
        %v526 = vrot.slane %v512, %v525
        %v527 = vcombine.low %v494, %v510
        %v528 = vcombine.high %v494, %v510
        %v530 = vunpack.c.l.s4 1934713408
        %v531 = vunpack.c.0.s8 %v530
        %v532 = vlaneseq
        %v533 = vshrl.u32 %v532, 7
        %v534 = vsub.s32 %v531, %v533
        %v535 = vrot.slane %v527, %v534
        %v537 = vunpack.c.l.s4 1934713408
        %v538 = vunpack.c.0.s8 %v537
        %v539 = vlaneseq
        %v540 = vshrl.u32 %v539, 7
        %v541 = vsub.s32 %v538, %v540
        %v542 = vrot.slane %v528, %v541
        %v543 = vcombine.high %v519, 0.0
        %v544 = vcombine.high %v526, 0.0
        %v545 = vcombine.high %v535, 0.0
        %v546 = vcombine.high %v542, 0.0
        %v547 = vcombine.low %v519, %v526
        %v549 = vunpack.c.l.s4 1983009808
        %v550 = vunpack.c.0.s8 %v549
        %v551 = vlaneseq
        %v552 = vshrl.u32 %v551, 7
        %v553 = vsub.s32 %v550, %v552
        %v554 = vrot.slane %v547, %v553
        %v555 = vcombine.low %v543, %v544
        %v557 = vunpack.c.l.s4 1983009808
        %v558 = vunpack.c.0.s8 %v557
        %v559 = vlaneseq
        %v560 = vshrl.u32 %v559, 7
        %v561 = vsub.s32 %v558, %v560
        %v562 = vrot.slane %v555, %v561
        %v563 = vcombine.low %v535, %v542
        %v565 = vunpack.c.l.s4 1983009808
        %v566 = vunpack.c.0.s8 %v565
        %v567 = vlaneseq
        %v568 = vshrl.u32 %v567, 7
        %v569 = vsub.s32 %v566, %v568
        %v570 = vrot.slane %v563, %v569
        %v571 = vcombine.low %v545, %v546
        %v573 = vunpack.c.l.s4 1983009808
        %v574 = vunpack.c.0.s8 %v573
        %v575 = vlaneseq
        %v576 = vshrl.u32 %v575, 7
        %v577 = vsub.s32 %v574, %v576
        %v578 = vrot.slane %v571, %v577
        %v579 = vcombine.low %v554, %v562
        %v580 = vcombine.high %v554, %v562
        %v582 = vunpack.c.l.s4 1934713408
        %v583 = vunpack.c.0.s8 %v582
        %v584 = vlaneseq
        %v585 = vshrl.u32 %v584, 7
        %v586 = vsub.s32 %v583, %v585
        %v587 = vrot.slane %v579, %v586
        %v589 = vunpack.c.l.s4 1934713408
        %v590 = vunpack.c.0.s8 %v589
        %v591 = vlaneseq
        %v592 = vshrl.u32 %v591, 7
        %v593 = vsub.s32 %v590, %v592
        %v594 = vrot.slane %v580, %v593
        %v595 = vcombine.low %v570, %v578
        %v596 = vcombine.high %v570, %v578
        %v598 = vunpack.c.l.s4 1934713408
        %v599 = vunpack.c.0.s8 %v598
        %v600 = vlaneseq
        %v601 = vshrl.u32 %v600, 7
        %v602 = vsub.s32 %v599, %v601
        %v603 = vrot.slane %v595, %v602
        %v605 = vunpack.c.l.s4 1934713408
        %v606 = vunpack.c.0.s8 %v605
        %v607 = vlaneseq
        %v608 = vshrl.u32 %v607, 7
        %v609 = vsub.s32 %v606, %v608
        %v610 = vrot.slane %v596, %v609
        %v611 = vcombine.low %v587, %v603
        %v612 = vcombine.high %v587, %v603
        %v613 = vcombine.low %v594, %v610
        %v614 = vcombine.high %v594, %v610
        %615 = vrot.lane.b32.xlu0 %v318, 64
        %v616 = vpop.permute.xlu0 %615
        %617 = vrot.lane.b32.xlu0 %v323, 64
        %v618 = vpop.permute.xlu0 %617
        %619 = vrot.lane.b32.xlu0 %v326, 64
        %v620 = vpop.permute.xlu0 %619
        %621 = vrot.lane.b32.xlu0 %v329, 64
        %v622 = vpop.permute.xlu0 %621
        %v627 = vcombine.low %v616, %v620
        %v628 = vcombine.high %v616, %v620
        %v630 = vunpack.c.l.s4 1983009808
        %v631 = vunpack.c.0.s8 %v630
        %v632 = vlaneseq
        %v633 = vshrl.u32 %v632, 7
        %v634 = vsub.s32 %v631, %v633
        %v635 = vrot.slane %v627, %v634
        %v637 = vunpack.c.l.s4 1983009808
        %v638 = vunpack.c.0.s8 %v637
        %v639 = vlaneseq
        %v640 = vshrl.u32 %v639, 7
        %v641 = vsub.s32 %v638, %v640
        %v642 = vrot.slane %v628, %v641
        %v643 = vcombine.low %v618, %v622
        %v644 = vcombine.high %v618, %v622
        %v646 = vunpack.c.l.s4 1983009808
        %v647 = vunpack.c.0.s8 %v646
        %v648 = vlaneseq
        %v649 = vshrl.u32 %v648, 7
        %v650 = vsub.s32 %v647, %v649
        %v651 = vrot.slane %v643, %v650
        %v653 = vunpack.c.l.s4 1983009808
        %v654 = vunpack.c.0.s8 %v653
        %v655 = vlaneseq
        %v656 = vshrl.u32 %v655, 7
        %v657 = vsub.s32 %v654, %v656
        %v658 = vrot.slane %v644, %v657
        %v659 = vcombine.low %v635, %v651
        %v660 = vcombine.high %v635, %v651
        %v662 = vunpack.c.l.s4 1934713408
        %v663 = vunpack.c.0.s8 %v662
        %v664 = vlaneseq
        %v665 = vshrl.u32 %v664, 7
        %v666 = vsub.s32 %v663, %v665
        %v667 = vrot.slane %v659, %v666
        %v669 = vunpack.c.l.s4 1934713408
        %v670 = vunpack.c.0.s8 %v669
        %v671 = vlaneseq
        %v672 = vshrl.u32 %v671, 7
        %v673 = vsub.s32 %v670, %v672
        %v674 = vrot.slane %v660, %v673
        %v675 = vcombine.low %v642, %v658
        %v676 = vcombine.high %v642, %v658
        %v678 = vunpack.c.l.s4 1934713408
        %v679 = vunpack.c.0.s8 %v678
        %v680 = vlaneseq
        %v681 = vshrl.u32 %v680, 7
        %v682 = vsub.s32 %v679, %v681
        %v683 = vrot.slane %v675, %v682
        %v685 = vunpack.c.l.s4 1934713408
        %v686 = vunpack.c.0.s8 %v685
        %v687 = vlaneseq
        %v688 = vshrl.u32 %v687, 7
        %v689 = vsub.s32 %v686, %v688
        %v690 = vrot.slane %v676, %v689
        %v691 = vcombine.high %v667, 0.0
        %v692 = vcombine.high %v674, 0.0
        %v693 = vcombine.high %v683, 0.0
        %v694 = vcombine.high %v690, 0.0
        %v695 = vcombine.low %v667, %v674
        %v697 = vunpack.c.l.s4 1983009808
        %v698 = vunpack.c.0.s8 %v697
        %v699 = vlaneseq
        %v700 = vshrl.u32 %v699, 7
        %v701 = vsub.s32 %v698, %v700
        %v702 = vrot.slane %v695, %v701
        %v703 = vcombine.low %v691, %v692
        %v705 = vunpack.c.l.s4 1983009808
        %v706 = vunpack.c.0.s8 %v705
        %v707 = vlaneseq
        %v708 = vshrl.u32 %v707, 7
        %v709 = vsub.s32 %v706, %v708
        %v710 = vrot.slane %v703, %v709
        %v711 = vcombine.low %v683, %v690
        %v713 = vunpack.c.l.s4 1983009808
        %v714 = vunpack.c.0.s8 %v713
        %v715 = vlaneseq
        %v716 = vshrl.u32 %v715, 7
        %v717 = vsub.s32 %v714, %v716
        %v718 = vrot.slane %v711, %v717
        %v719 = vcombine.low %v693, %v694
        %v721 = vunpack.c.l.s4 1983009808
        %v722 = vunpack.c.0.s8 %v721
        %v723 = vlaneseq
        %v724 = vshrl.u32 %v723, 7
        %v725 = vsub.s32 %v722, %v724
        %v726 = vrot.slane %v719, %v725
        %v727 = vcombine.low %v702, %v710
        %v728 = vcombine.high %v702, %v710
        %v730 = vunpack.c.l.s4 1934713408
        %v731 = vunpack.c.0.s8 %v730
        %v732 = vlaneseq
        %v733 = vshrl.u32 %v732, 7
        %v734 = vsub.s32 %v731, %v733
        %v735 = vrot.slane %v727, %v734
        %v737 = vunpack.c.l.s4 1934713408
        %v738 = vunpack.c.0.s8 %v737
        %v739 = vlaneseq
        %v740 = vshrl.u32 %v739, 7
        %v741 = vsub.s32 %v738, %v740
        %v742 = vrot.slane %v728, %v741
        %v743 = vcombine.low %v718, %v726
        %v744 = vcombine.high %v718, %v726
        %v746 = vunpack.c.l.s4 1934713408
        %v747 = vunpack.c.0.s8 %v746
        %v748 = vlaneseq
        %v749 = vshrl.u32 %v748, 7
        %v750 = vsub.s32 %v747, %v749
        %v751 = vrot.slane %v743, %v750
        %v753 = vunpack.c.l.s4 1934713408
        %v754 = vunpack.c.0.s8 %v753
        %v755 = vlaneseq
        %v756 = vshrl.u32 %v755, 7
        %v757 = vsub.s32 %v754, %v756
        %v758 = vrot.slane %v744, %v757
        %v759 = vcombine.low %v735, %v751
        %v760 = vcombine.high %v735, %v751
        %v761 = vcombine.low %v742, %v758
        %v762 = vcombine.high %v742, %v758
        %vm763 = vcmask 64512
        %v765 = vsel %vm763, %v463, 0
        %v768 = vsel %vm763, %v611, 0
        %770 = vmatprep.subr.mxu0 0.0
        %771 = vmatpush1.xpose.msra.mxu0 0.0
        %772 = vmatprep.subr.mxu0 0.0
        %773 = vmatpush1.xpose.msra.mxu0 0.0
        %774 = vmatprep.subr.mxu0 0.0
        %775 = vmatpush1.xpose.msra.mxu0 0.0
        %776 = vmatprep.subr.mxu0 0.0
        %777 = vmatpush1.xpose.msra.mxu0 0.0
        %778 = vmatprep.subr.mxu0 0.0
        %779 = vmatpush1.xpose.msra.mxu0 0.0
        %780 = vmatprep.subr.mxu0 0.0
        %781 = vmatpush1.xpose.msra.mxu0 0.0
        %782 = vmatprep.subr.mxu0 0.0
        %783 = vmatpush1.xpose.msra.mxu0 0.0
        %784 = vmatprep.subr.mxu0 0.0
        %785 = vmatpush1.xpose.msra.mxu0 0.0
        %786 = vmatprep.subr.mxu0 0.0
        %787 = vmatpush1.xpose.msra.mxu0 0.0
        %788 = vmatprep.subr.mxu0 0.0
        %789 = vmatpush1.xpose.msra.mxu0 0.0
        %790 = vmatprep.subr.mxu0 0.0
        %791 = vmatpush1.xpose.msra.mxu0 0.0
        %792 = vmatprep.subr.mxu0 0.0
        %793 = vmatpush1.xpose.msra.mxu0 0.0
        %794 = vmatprep.subr.mxu0 0.0
        %795 = vmatpush1.xpose.msra.mxu0 0.0
        %796 = vmatprep.subr.mxu0 0.0
        %797 = vmatpush1.xpose.msra.mxu0 0.0
        %798 = vmatprep.subr.mxu0 0.0
        %799 = vmatpush1.xpose.msra.mxu0 0.0
        %800 = vmatprep.subr.mxu0 0.0
        %801 = vmatpush1.xpose.msra.mxu0 %v768
        %802 = vmatprep.subr.mxu0 0.0
        %803 = vmatpush2.xpose.msra.mxu0 0.0
        %804 = vmatprep.subr.mxu0 0.0
        %805 = vmatpush2.xpose.msra.mxu0 0.0
        %806 = vmatprep.subr.mxu0 0.0
        %807 = vmatpush2.xpose.msra.mxu0 0.0
        %808 = vmatprep.subr.mxu0 0.0
        %809 = vmatpush2.xpose.msra.mxu0 0.0
        %810 = vmatprep.subr.mxu0 0.0
        %811 = vmatpush2.xpose.msra.mxu0 0.0
        %812 = vmatprep.subr.mxu0 0.0
        %813 = vmatpush2.xpose.msra.mxu0 0.0
        %814 = vmatprep.subr.mxu0 0.0
        %815 = vmatpush2.xpose.msra.mxu0 0.0
        %816 = vmatprep.subr.mxu0 0.0
        %817 = vmatpush2.xpose.msra.mxu0 0.0
        %818 = vmatprep.subr.mxu0 0.0
        %819 = vmatpush2.xpose.msra.mxu0 0.0
        %820 = vmatprep.subr.mxu0 0.0
        %821 = vmatpush2.xpose.msra.mxu0 0.0
        %822 = vmatprep.subr.mxu0 0.0
        %823 = vmatpush2.xpose.msra.mxu0 0.0
        %824 = vmatprep.subr.mxu0 0.0
        %825 = vmatpush2.xpose.msra.mxu0 0.0
        %826 = vmatprep.subr.mxu0 0.0
        %827 = vmatpush2.xpose.msra.mxu0 0.0
        %828 = vmatprep.subr.mxu0 0.0
        %829 = vmatpush2.xpose.msra.mxu0 0.0
        %830 = vmatprep.subr.mxu0 0.0
        %831 = vmatpush2.xpose.msra.mxu0 0.0
        %832 = vmatprep.subr.mxu0 0.0
        %833 = vmatpush2.xpose.msra.mxu0 0.0
        %834 = vmatprep.mubr.f32.mxu0 0.0
        %835 = vmatmul.mubr.f32.gmra.mxu0 %v765
        %v836 = vpop.f32.mrf.mxu0
        %v837 = vadd.f32 0.0, %v836
        %v838 = vpop.f32.mrf.mxu0
        %839 = vdwg.mxu0
        %v841 = vsel %vm763, %v464, 0
        %v844 = vsel %vm763, %v612, 0
        %846 = vmatprep.subr.mxu0 0.0
        %847 = vmatpush1.xpose.msra.mxu0 0.0
        %848 = vmatprep.subr.mxu0 0.0
        %849 = vmatpush1.xpose.msra.mxu0 0.0
        %850 = vmatprep.subr.mxu0 0.0
        %851 = vmatpush1.xpose.msra.mxu0 0.0
        %852 = vmatprep.subr.mxu0 0.0
        %853 = vmatpush1.xpose.msra.mxu0 0.0
        %854 = vmatprep.subr.mxu0 0.0
        %855 = vmatpush1.xpose.msra.mxu0 0.0
        %856 = vmatprep.subr.mxu0 0.0
        %857 = vmatpush1.xpose.msra.mxu0 0.0
        %858 = vmatprep.subr.mxu0 0.0
        %859 = vmatpush1.xpose.msra.mxu0 0.0
        %860 = vmatprep.subr.mxu0 0.0
        %861 = vmatpush1.xpose.msra.mxu0 0.0
        %862 = vmatprep.subr.mxu0 0.0
        %863 = vmatpush1.xpose.msra.mxu0 0.0
        %864 = vmatprep.subr.mxu0 0.0
        %865 = vmatpush1.xpose.msra.mxu0 0.0
        %866 = vmatprep.subr.mxu0 0.0
        %867 = vmatpush1.xpose.msra.mxu0 0.0
        %868 = vmatprep.subr.mxu0 0.0
        %869 = vmatpush1.xpose.msra.mxu0 0.0
        %870 = vmatprep.subr.mxu0 0.0
        %871 = vmatpush1.xpose.msra.mxu0 0.0
        %872 = vmatprep.subr.mxu0 0.0
        %873 = vmatpush1.xpose.msra.mxu0 0.0
        %874 = vmatprep.subr.mxu0 0.0
        %875 = vmatpush1.xpose.msra.mxu0 0.0
        %876 = vmatprep.subr.mxu0 0.0
        %877 = vmatpush1.xpose.msra.mxu0 %v844
        %878 = vmatprep.subr.mxu0 0.0
        %879 = vmatpush2.xpose.msra.mxu0 0.0
        %880 = vmatprep.subr.mxu0 0.0
        %881 = vmatpush2.xpose.msra.mxu0 0.0
        %882 = vmatprep.subr.mxu0 0.0
        %883 = vmatpush2.xpose.msra.mxu0 0.0
        %884 = vmatprep.subr.mxu0 0.0
        %885 = vmatpush2.xpose.msra.mxu0 0.0
        %886 = vmatprep.subr.mxu0 0.0
        %887 = vmatpush2.xpose.msra.mxu0 0.0
        %888 = vmatprep.subr.mxu0 0.0
        %889 = vmatpush2.xpose.msra.mxu0 0.0
        %890 = vmatprep.subr.mxu0 0.0
        %891 = vmatpush2.xpose.msra.mxu0 0.0
        %892 = vmatprep.subr.mxu0 0.0
        %893 = vmatpush2.xpose.msra.mxu0 0.0
        %894 = vmatprep.subr.mxu0 0.0
        %895 = vmatpush2.xpose.msra.mxu0 0.0
        %896 = vmatprep.subr.mxu0 0.0
        %897 = vmatpush2.xpose.msra.mxu0 0.0
        %898 = vmatprep.subr.mxu0 0.0
        %899 = vmatpush2.xpose.msra.mxu0 0.0
        %900 = vmatprep.subr.mxu0 0.0
        %901 = vmatpush2.xpose.msra.mxu0 0.0
        %902 = vmatprep.subr.mxu0 0.0
        %903 = vmatpush2.xpose.msra.mxu0 0.0
        %904 = vmatprep.subr.mxu0 0.0
        %905 = vmatpush2.xpose.msra.mxu0 0.0
        %906 = vmatprep.subr.mxu0 0.0
        %907 = vmatpush2.xpose.msra.mxu0 0.0
        %908 = vmatprep.subr.mxu0 0.0
        %909 = vmatpush2.xpose.msra.mxu0 0.0
        %910 = vmatprep.mubr.f32.mxu0 0.0
        %911 = vmatmul.mubr.f32.gmra.mxu0 %v841
        %v912 = vpop.f32.mrf.mxu0
        %v913 = vadd.f32 0.0, %v912
        %v914 = vpop.f32.mrf.mxu0
        %915 = vdwg.mxu0
        %v917 = vsel %vm763, %v465, 0
        %v920 = vsel %vm763, %v613, 0
        %922 = vmatprep.subr.mxu0 0.0
        %923 = vmatpush1.xpose.msra.mxu0 0.0
        %924 = vmatprep.subr.mxu0 0.0
        %925 = vmatpush1.xpose.msra.mxu0 0.0
        %926 = vmatprep.subr.mxu0 0.0
        %927 = vmatpush1.xpose.msra.mxu0 0.0
        %928 = vmatprep.subr.mxu0 0.0
        %929 = vmatpush1.xpose.msra.mxu0 0.0
        %930 = vmatprep.subr.mxu0 0.0
        %931 = vmatpush1.xpose.msra.mxu0 0.0
        %932 = vmatprep.subr.mxu0 0.0
        %933 = vmatpush1.xpose.msra.mxu0 0.0
        %934 = vmatprep.subr.mxu0 0.0
        %935 = vmatpush1.xpose.msra.mxu0 0.0
        %936 = vmatprep.subr.mxu0 0.0
        %937 = vmatpush1.xpose.msra.mxu0 0.0
        %938 = vmatprep.subr.mxu0 0.0
        %939 = vmatpush1.xpose.msra.mxu0 0.0
        %940 = vmatprep.subr.mxu0 0.0
        %941 = vmatpush1.xpose.msra.mxu0 0.0
        %942 = vmatprep.subr.mxu0 0.0
        %943 = vmatpush1.xpose.msra.mxu0 0.0
        %944 = vmatprep.subr.mxu0 0.0
        %945 = vmatpush1.xpose.msra.mxu0 0.0
        %946 = vmatprep.subr.mxu0 0.0
        %947 = vmatpush1.xpose.msra.mxu0 0.0
        %948 = vmatprep.subr.mxu0 0.0
        %949 = vmatpush1.xpose.msra.mxu0 0.0
        %950 = vmatprep.subr.mxu0 0.0
        %951 = vmatpush1.xpose.msra.mxu0 0.0
        %952 = vmatprep.subr.mxu0 0.0
        %953 = vmatpush1.xpose.msra.mxu0 %v920
        %954 = vmatprep.subr.mxu0 0.0
        %955 = vmatpush2.xpose.msra.mxu0 0.0
        %956 = vmatprep.subr.mxu0 0.0
        %957 = vmatpush2.xpose.msra.mxu0 0.0
        %958 = vmatprep.subr.mxu0 0.0
        %959 = vmatpush2.xpose.msra.mxu0 0.0
        %960 = vmatprep.subr.mxu0 0.0
        %961 = vmatpush2.xpose.msra.mxu0 0.0
        %962 = vmatprep.subr.mxu0 0.0
        %963 = vmatpush2.xpose.msra.mxu0 0.0
        %964 = vmatprep.subr.mxu0 0.0
        %965 = vmatpush2.xpose.msra.mxu0 0.0
        %966 = vmatprep.subr.mxu0 0.0
        %967 = vmatpush2.xpose.msra.mxu0 0.0
        %968 = vmatprep.subr.mxu0 0.0
        %969 = vmatpush2.xpose.msra.mxu0 0.0
        %970 = vmatprep.subr.mxu0 0.0
        %971 = vmatpush2.xpose.msra.mxu0 0.0
        %972 = vmatprep.subr.mxu0 0.0
        %973 = vmatpush2.xpose.msra.mxu0 0.0
        %974 = vmatprep.subr.mxu0 0.0
        %975 = vmatpush2.xpose.msra.mxu0 0.0
        %976 = vmatprep.subr.mxu0 0.0
        %977 = vmatpush2.xpose.msra.mxu0 0.0
        %978 = vmatprep.subr.mxu0 0.0
        %979 = vmatpush2.xpose.msra.mxu0 0.0
        %980 = vmatprep.subr.mxu0 0.0
        %981 = vmatpush2.xpose.msra.mxu0 0.0
        %982 = vmatprep.subr.mxu0 0.0
        %983 = vmatpush2.xpose.msra.mxu0 0.0
        %984 = vmatprep.subr.mxu0 0.0
        %985 = vmatpush2.xpose.msra.mxu0 0.0
        %986 = vmatprep.mubr.f32.mxu0 0.0
        %987 = vmatmul.mubr.f32.gmra.mxu0 %v917
        %v988 = vpop.f32.mrf.mxu0
        %v989 = vadd.f32 0.0, %v988
        %v990 = vpop.f32.mrf.mxu0
        %991 = vdwg.mxu0
        %v993 = vsel %vm763, %v466, 0
        %v996 = vsel %vm763, %v614, 0
        %998 = vmatprep.subr.mxu0 0.0
        %999 = vmatpush1.xpose.msra.mxu0 0.0
        %1000 = vmatprep.subr.mxu0 0.0
        %1001 = vmatpush1.xpose.msra.mxu0 0.0
        %1002 = vmatprep.subr.mxu0 0.0
        %1003 = vmatpush1.xpose.msra.mxu0 0.0
        %1004 = vmatprep.subr.mxu0 0.0
        %1005 = vmatpush1.xpose.msra.mxu0 0.0
        %1006 = vmatprep.subr.mxu0 0.0
        %1007 = vmatpush1.xpose.msra.mxu0 0.0
        %1008 = vmatprep.subr.mxu0 0.0
        %1009 = vmatpush1.xpose.msra.mxu0 0.0
        %1010 = vmatprep.subr.mxu0 0.0
        %1011 = vmatpush1.xpose.msra.mxu0 0.0
        %1012 = vmatprep.subr.mxu0 0.0
        %1013 = vmatpush1.xpose.msra.mxu0 0.0
        %1014 = vmatprep.subr.mxu0 0.0
        %1015 = vmatpush1.xpose.msra.mxu0 0.0
        %1016 = vmatprep.subr.mxu0 0.0
        %1017 = vmatpush1.xpose.msra.mxu0 0.0
        %1018 = vmatprep.subr.mxu0 0.0
        %1019 = vmatpush1.xpose.msra.mxu0 0.0
        %1020 = vmatprep.subr.mxu0 0.0
        %1021 = vmatpush1.xpose.msra.mxu0 0.0
        %1022 = vmatprep.subr.mxu0 0.0
        %1023 = vmatpush1.xpose.msra.mxu0 0.0
        %1024 = vmatprep.subr.mxu0 0.0
        %1025 = vmatpush1.xpose.msra.mxu0 0.0
        %1026 = vmatprep.subr.mxu0 0.0
        %1027 = vmatpush1.xpose.msra.mxu0 0.0
        %1028 = vmatprep.subr.mxu0 0.0
        %1029 = vmatpush1.xpose.msra.mxu0 %v996
        %1030 = vmatprep.subr.mxu0 0.0
        %1031 = vmatpush2.xpose.msra.mxu0 0.0
        %1032 = vmatprep.subr.mxu0 0.0
        %1033 = vmatpush2.xpose.msra.mxu0 0.0
        %1034 = vmatprep.subr.mxu0 0.0
        %1035 = vmatpush2.xpose.msra.mxu0 0.0
        %1036 = vmatprep.subr.mxu0 0.0
        %1037 = vmatpush2.xpose.msra.mxu0 0.0
        %1038 = vmatprep.subr.mxu0 0.0
        %1039 = vmatpush2.xpose.msra.mxu0 0.0
        %1040 = vmatprep.subr.mxu0 0.0
        %1041 = vmatpush2.xpose.msra.mxu0 0.0
        %1042 = vmatprep.subr.mxu0 0.0
        %1043 = vmatpush2.xpose.msra.mxu0 0.0
        %1044 = vmatprep.subr.mxu0 0.0
        %1045 = vmatpush2.xpose.msra.mxu0 0.0
        %1046 = vmatprep.subr.mxu0 0.0
        %1047 = vmatpush2.xpose.msra.mxu0 0.0
        %1048 = vmatprep.subr.mxu0 0.0
        %1049 = vmatpush2.xpose.msra.mxu0 0.0
        %1050 = vmatprep.subr.mxu0 0.0
        %1051 = vmatpush2.xpose.msra.mxu0 0.0
        %1052 = vmatprep.subr.mxu0 0.0
        %1053 = vmatpush2.xpose.msra.mxu0 0.0
        %1054 = vmatprep.subr.mxu0 0.0
        %1055 = vmatpush2.xpose.msra.mxu0 0.0
        %1056 = vmatprep.subr.mxu0 0.0
        %1057 = vmatpush2.xpose.msra.mxu0 0.0
        %1058 = vmatprep.subr.mxu0 0.0
        %1059 = vmatpush2.xpose.msra.mxu0 0.0
        %1060 = vmatprep.subr.mxu0 0.0
        %1061 = vmatpush2.xpose.msra.mxu0 0.0
        %1062 = vmatprep.mubr.f32.mxu0 0.0
        %1063 = vmatmul.mubr.f32.gmra.mxu0 %v993
        %v1064 = vpop.f32.mrf.mxu0
        %v1065 = vadd.f32 0.0, %v1064
        %v1066 = vpop.f32.mrf.mxu0
        %1067 = vdwg.mxu0
        %v1068 = vsel %vm763, %v837, -inf
        %1069 = vmax.xlane.f32.xlu0 %v1068
        %v1070 = vpop.xlane.xlu0 %1069
        %v1071 = vsel %vm763, %v913, -inf
        %1072 = vmax.xlane.f32.xlu0 %v1071
        %v1073 = vpop.xlane.xlu0 %1072
        %v1074 = vsel %vm763, %v989, -inf
        %1075 = vmax.xlane.f32.xlu0 %v1074
        %v1076 = vpop.xlane.xlu0 %1075
        %v1077 = vsel %vm763, %v1065, -inf
        %1078 = vmax.xlane.f32.xlu0 %v1077
        %v1079 = vpop.xlane.xlu0 %1078
        %v1080 = vsub.f32 %v837, %v1070
        %v1081 = vsub.f32 %v913, %v1073
        %v1082 = vsub.f32 %v989, %v1076
        %v1083 = vsub.f32 %v1065, %v1079
        %v1084 = vmul.f32 %v1080, 1.442695
        %v1085 = vpow.pop %v1084
        %v1086 = vmul.f32 %v1081, 1.442695
        %v1087 = vpow.pop %v1086
        %v1088 = vmul.f32 %v1082, 1.442695
        %v1089 = vpow.pop %v1088
        %v1090 = vmul.f32 %v1083, 1.442695
        %v1091 = vpow.pop %v1090
        %v1092 = vsel %vm763, %v1085, 0.0
        %1093 = vadd.xlane.f32.xlu0 %v1092
        %v1094 = vpop.xlane.xlu0 %1093
        %v1095 = vsel %vm763, %v1087, 0.0
        %1096 = vadd.xlane.f32.xlu0 %v1095
        %v1097 = vpop.xlane.xlu0 %1096
        %v1098 = vsel %vm763, %v1089, 0.0
        %1099 = vadd.xlane.f32.xlu0 %v1098
        %v1100 = vpop.xlane.xlu0 %1099
        %v1101 = vsel %vm763, %v1091, 0.0
        %1102 = vadd.xlane.f32.xlu0 %v1101
        %v1103 = vpop.xlane.xlu0 %1102
        %v1104 = vrcp.pop %v1094
        %v1105 = vrcp.pop %v1097
        %v1106 = vrcp.pop %v1100
        %v1107 = vrcp.pop %v1103
        %v1108 = vmul.f32 %v1085, %v1104
        %v1109 = vmul.f32 %v1087, %v1105
        %v1110 = vmul.f32 %v1089, %v1106
        %v1111 = vmul.f32 %v1091, %v1107
        %v1113 = vsel %vm763, %v1108, 0
        %1115 = vmatprep.subr.mxu0 0.0
        %1116 = vmatpush1.msra.mxu0 0.0
        %1117 = vmatprep.subr.mxu0 0.0
        %1118 = vmatpush1.msra.mxu0 0.0
        %1119 = vmatprep.subr.mxu0 0.0
        %1120 = vmatpush1.msra.mxu0 0.0
        %1121 = vmatprep.subr.mxu0 0.0
        %1122 = vmatpush1.msra.mxu0 0.0
        %1123 = vmatprep.subr.mxu0 0.0
        %1124 = vmatpush1.msra.mxu0 0.0
        %1125 = vmatprep.subr.mxu0 0.0
        %1126 = vmatpush1.msra.mxu0 0.0
        %1127 = vmatprep.subr.mxu0 0.0
        %1128 = vmatpush1.msra.mxu0 0.0
        %1129 = vmatprep.subr.mxu0 0.0
        %1130 = vmatpush1.msra.mxu0 0.0
        %1131 = vmatprep.subr.mxu0 0.0
        %1132 = vmatpush1.msra.mxu0 0.0
        %1133 = vmatprep.subr.mxu0 0.0
        %1134 = vmatpush1.msra.mxu0 0.0
        %1135 = vmatprep.subr.mxu0 0.0
        %1136 = vmatpush1.msra.mxu0 0.0
        %1137 = vmatprep.subr.mxu0 0.0
        %1138 = vmatpush1.msra.mxu0 0.0
        %1139 = vmatprep.subr.mxu0 0.0
        %1140 = vmatpush1.msra.mxu0 0.0
        %1141 = vmatprep.subr.mxu0 0.0
        %1142 = vmatpush1.msra.mxu0 0.0
        %1143 = vmatprep.subr.mxu0 0.0
        %1144 = vmatpush1.msra.mxu0 0.0
        %1145 = vmatprep.subr.mxu0 0.0
        %1146 = vmatpush1.msra.mxu0 %v759
        %1147 = vmatprep.subr.mxu0 0.0
        %1148 = vmatpush2.msra.mxu0 0.0
        %1149 = vmatprep.subr.mxu0 0.0
        %1150 = vmatpush2.msra.mxu0 0.0
        %1151 = vmatprep.subr.mxu0 0.0
        %1152 = vmatpush2.msra.mxu0 0.0
        %1153 = vmatprep.subr.mxu0 0.0
        %1154 = vmatpush2.msra.mxu0 0.0
        %1155 = vmatprep.subr.mxu0 0.0
        %1156 = vmatpush2.msra.mxu0 0.0
        %1157 = vmatprep.subr.mxu0 0.0
        %1158 = vmatpush2.msra.mxu0 0.0
        %1159 = vmatprep.subr.mxu0 0.0
        %1160 = vmatpush2.msra.mxu0 0.0
        %1161 = vmatprep.subr.mxu0 0.0
        %1162 = vmatpush2.msra.mxu0 0.0
        %1163 = vmatprep.subr.mxu0 0.0
        %1164 = vmatpush2.msra.mxu0 0.0
        %1165 = vmatprep.subr.mxu0 0.0
        %1166 = vmatpush2.msra.mxu0 0.0
        %1167 = vmatprep.subr.mxu0 0.0
        %1168 = vmatpush2.msra.mxu0 0.0
        %1169 = vmatprep.subr.mxu0 0.0
        %1170 = vmatpush2.msra.mxu0 0.0
        %1171 = vmatprep.subr.mxu0 0.0
        %1172 = vmatpush2.msra.mxu0 0.0
        %1173 = vmatprep.subr.mxu0 0.0
        %1174 = vmatpush2.msra.mxu0 0.0
        %1175 = vmatprep.subr.mxu0 0.0
        %1176 = vmatpush2.msra.mxu0 0.0
        %1177 = vmatprep.subr.mxu0 0.0
        %1178 = vmatpush2.msra.mxu0 0.0
        %1179 = vmatprep.mubr.f32.mxu0 0.0
        %1180 = vmatmul.mubr.f32.gmra.mxu0 %v1113
        %v1181 = vpop.f32.mrf.mxu0
        %v1182 = vadd.f32 0.0, %v1181
        %v1183 = vpop.f32.mrf.mxu0
        %1184 = vdwg.mxu0
        %v1186 = vsel %vm763, %v1109, 0
        %1188 = vmatprep.subr.mxu0 0.0
        %1189 = vmatpush1.msra.mxu0 0.0
        %1190 = vmatprep.subr.mxu0 0.0
        %1191 = vmatpush1.msra.mxu0 0.0
        %1192 = vmatprep.subr.mxu0 0.0
        %1193 = vmatpush1.msra.mxu0 0.0
        %1194 = vmatprep.subr.mxu0 0.0
        %1195 = vmatpush1.msra.mxu0 0.0
        %1196 = vmatprep.subr.mxu0 0.0
        %1197 = vmatpush1.msra.mxu0 0.0
        %1198 = vmatprep.subr.mxu0 0.0
        %1199 = vmatpush1.msra.mxu0 0.0
        %1200 = vmatprep.subr.mxu0 0.0
        %1201 = vmatpush1.msra.mxu0 0.0
        %1202 = vmatprep.subr.mxu0 0.0
        %1203 = vmatpush1.msra.mxu0 0.0
        %1204 = vmatprep.subr.mxu0 0.0
        %1205 = vmatpush1.msra.mxu0 0.0
        %1206 = vmatprep.subr.mxu0 0.0
        %1207 = vmatpush1.msra.mxu0 0.0
        %1208 = vmatprep.subr.mxu0 0.0
        %1209 = vmatpush1.msra.mxu0 0.0
        %1210 = vmatprep.subr.mxu0 0.0
        %1211 = vmatpush1.msra.mxu0 0.0
        %1212 = vmatprep.subr.mxu0 0.0
        %1213 = vmatpush1.msra.mxu0 0.0
        %1214 = vmatprep.subr.mxu0 0.0
        %1215 = vmatpush1.msra.mxu0 0.0
        %1216 = vmatprep.subr.mxu0 0.0
        %1217 = vmatpush1.msra.mxu0 0.0
        %1218 = vmatprep.subr.mxu0 0.0
        %1219 = vmatpush1.msra.mxu0 %v760
        %1220 = vmatprep.subr.mxu0 0.0
        %1221 = vmatpush2.msra.mxu0 0.0
        %1222 = vmatprep.subr.mxu0 0.0
        %1223 = vmatpush2.msra.mxu0 0.0
        %1224 = vmatprep.subr.mxu0 0.0
        %1225 = vmatpush2.msra.mxu0 0.0
        %1226 = vmatprep.subr.mxu0 0.0
        %1227 = vmatpush2.msra.mxu0 0.0
        %1228 = vmatprep.subr.mxu0 0.0
        %1229 = vmatpush2.msra.mxu0 0.0
        %1230 = vmatprep.subr.mxu0 0.0
        %1231 = vmatpush2.msra.mxu0 0.0
        %1232 = vmatprep.subr.mxu0 0.0
        %1233 = vmatpush2.msra.mxu0 0.0
        %1234 = vmatprep.subr.mxu0 0.0
        %1235 = vmatpush2.msra.mxu0 0.0
        %1236 = vmatprep.subr.mxu0 0.0
        %1237 = vmatpush2.msra.mxu0 0.0
        %1238 = vmatprep.subr.mxu0 0.0
        %1239 = vmatpush2.msra.mxu0 0.0
        %1240 = vmatprep.subr.mxu0 0.0
        %1241 = vmatpush2.msra.mxu0 0.0
        %1242 = vmatprep.subr.mxu0 0.0
        %1243 = vmatpush2.msra.mxu0 0.0
        %1244 = vmatprep.subr.mxu0 0.0
        %1245 = vmatpush2.msra.mxu0 0.0
        %1246 = vmatprep.subr.mxu0 0.0
        %1247 = vmatpush2.msra.mxu0 0.0
        %1248 = vmatprep.subr.mxu0 0.0
        %1249 = vmatpush2.msra.mxu0 0.0
        %1250 = vmatprep.subr.mxu0 0.0
        %1251 = vmatpush2.msra.mxu0 0.0
        %1252 = vmatprep.mubr.f32.mxu0 0.0
        %1253 = vmatmul.mubr.f32.gmra.mxu0 %v1186
        %v1254 = vpop.f32.mrf.mxu0
        %v1255 = vadd.f32 0.0, %v1254
        %v1256 = vpop.f32.mrf.mxu0
        %1257 = vdwg.mxu0
        %v1259 = vsel %vm763, %v1110, 0
        %1261 = vmatprep.subr.mxu0 0.0
        %1262 = vmatpush1.msra.mxu0 0.0
        %1263 = vmatprep.subr.mxu0 0.0
        %1264 = vmatpush1.msra.mxu0 0.0
        %1265 = vmatprep.subr.mxu0 0.0
        %1266 = vmatpush1.msra.mxu0 0.0
        %1267 = vmatprep.subr.mxu0 0.0
        %1268 = vmatpush1.msra.mxu0 0.0
        %1269 = vmatprep.subr.mxu0 0.0
        %1270 = vmatpush1.msra.mxu0 0.0
        %1271 = vmatprep.subr.mxu0 0.0
        %1272 = vmatpush1.msra.mxu0 0.0
        %1273 = vmatprep.subr.mxu0 0.0
        %1274 = vmatpush1.msra.mxu0 0.0
        %1275 = vmatprep.subr.mxu0 0.0
        %1276 = vmatpush1.msra.mxu0 0.0
        %1277 = vmatprep.subr.mxu0 0.0
        %1278 = vmatpush1.msra.mxu0 0.0
        %1279 = vmatprep.subr.mxu0 0.0
        %1280 = vmatpush1.msra.mxu0 0.0
        %1281 = vmatprep.subr.mxu0 0.0
        %1282 = vmatpush1.msra.mxu0 0.0
        %1283 = vmatprep.subr.mxu0 0.0
        %1284 = vmatpush1.msra.mxu0 0.0
        %1285 = vmatprep.subr.mxu0 0.0
        %1286 = vmatpush1.msra.mxu0 0.0
        %1287 = vmatprep.subr.mxu0 0.0
        %1288 = vmatpush1.msra.mxu0 0.0
        %1289 = vmatprep.subr.mxu0 0.0
        %1290 = vmatpush1.msra.mxu0 0.0
        %1291 = vmatprep.subr.mxu0 0.0
        %1292 = vmatpush1.msra.mxu0 %v761
        %1293 = vmatprep.subr.mxu0 0.0
        %1294 = vmatpush2.msra.mxu0 0.0
        %1295 = vmatprep.subr.mxu0 0.0
        %1296 = vmatpush2.msra.mxu0 0.0
        %1297 = vmatprep.subr.mxu0 0.0
        %1298 = vmatpush2.msra.mxu0 0.0
        %1299 = vmatprep.subr.mxu0 0.0
        %1300 = vmatpush2.msra.mxu0 0.0
        %1301 = vmatprep.subr.mxu0 0.0
        %1302 = vmatpush2.msra.mxu0 0.0
        %1303 = vmatprep.subr.mxu0 0.0
        %1304 = vmatpush2.msra.mxu0 0.0
        %1305 = vmatprep.subr.mxu0 0.0
        %1306 = vmatpush2.msra.mxu0 0.0
        %1307 = vmatprep.subr.mxu0 0.0
        %1308 = vmatpush2.msra.mxu0 0.0
        %1309 = vmatprep.subr.mxu0 0.0
        %1310 = vmatpush2.msra.mxu0 0.0
        %1311 = vmatprep.subr.mxu0 0.0
        %1312 = vmatpush2.msra.mxu0 0.0
        %1313 = vmatprep.subr.mxu0 0.0
        %1314 = vmatpush2.msra.mxu0 0.0
        %1315 = vmatprep.subr.mxu0 0.0
        %1316 = vmatpush2.msra.mxu0 0.0
        %1317 = vmatprep.subr.mxu0 0.0
        %1318 = vmatpush2.msra.mxu0 0.0
        %1319 = vmatprep.subr.mxu0 0.0
        %1320 = vmatpush2.msra.mxu0 0.0
        %1321 = vmatprep.subr.mxu0 0.0
        %1322 = vmatpush2.msra.mxu0 0.0
        %1323 = vmatprep.subr.mxu0 0.0
        %1324 = vmatpush2.msra.mxu0 0.0
        %1325 = vmatprep.mubr.f32.mxu0 0.0
        %1326 = vmatmul.mubr.f32.gmra.mxu0 %v1259
        %v1327 = vpop.f32.mrf.mxu0
        %v1328 = vadd.f32 0.0, %v1327
        %v1329 = vpop.f32.mrf.mxu0
        %1330 = vdwg.mxu0
        %v1332 = vsel %vm763, %v1111, 0
        %1334 = vmatprep.subr.mxu0 0.0
        %1335 = vmatpush1.msra.mxu0 0.0
        %1336 = vmatprep.subr.mxu0 0.0
        %1337 = vmatpush1.msra.mxu0 0.0
        %1338 = vmatprep.subr.mxu0 0.0
        %1339 = vmatpush1.msra.mxu0 0.0
        %1340 = vmatprep.subr.mxu0 0.0
        %1341 = vmatpush1.msra.mxu0 0.0
        %1342 = vmatprep.subr.mxu0 0.0
        %1343 = vmatpush1.msra.mxu0 0.0
        %1344 = vmatprep.subr.mxu0 0.0
        %1345 = vmatpush1.msra.mxu0 0.0
        %1346 = vmatprep.subr.mxu0 0.0
        %1347 = vmatpush1.msra.mxu0 0.0
        %1348 = vmatprep.subr.mxu0 0.0
        %1349 = vmatpush1.msra.mxu0 0.0
        %1350 = vmatprep.subr.mxu0 0.0
        %1351 = vmatpush1.msra.mxu0 0.0
        %1352 = vmatprep.subr.mxu0 0.0
        %1353 = vmatpush1.msra.mxu0 0.0
        %1354 = vmatprep.subr.mxu0 0.0
        %1355 = vmatpush1.msra.mxu0 0.0
        %1356 = vmatprep.subr.mxu0 0.0
        %1357 = vmatpush1.msra.mxu0 0.0
        %1358 = vmatprep.subr.mxu0 0.0
        %1359 = vmatpush1.msra.mxu0 0.0
        %1360 = vmatprep.subr.mxu0 0.0
        %1361 = vmatpush1.msra.mxu0 0.0
        %1362 = vmatprep.subr.mxu0 0.0
        %1363 = vmatpush1.msra.mxu0 0.0
        %1364 = vmatprep.subr.mxu0 0.0
        %1365 = vmatpush1.msra.mxu0 %v762
        %1366 = vmatprep.subr.mxu0 0.0
        %1367 = vmatpush2.msra.mxu0 0.0
        %1368 = vmatprep.subr.mxu0 0.0
        %1369 = vmatpush2.msra.mxu0 0.0
        %1370 = vmatprep.subr.mxu0 0.0
        %1371 = vmatpush2.msra.mxu0 0.0
        %1372 = vmatprep.subr.mxu0 0.0
        %1373 = vmatpush2.msra.mxu0 0.0
        %1374 = vmatprep.subr.mxu0 0.0
        %1375 = vmatpush2.msra.mxu0 0.0
        %1376 = vmatprep.subr.mxu0 0.0
        %1377 = vmatpush2.msra.mxu0 0.0
        %1378 = vmatprep.subr.mxu0 0.0
        %1379 = vmatpush2.msra.mxu0 0.0
        %1380 = vmatprep.subr.mxu0 0.0
        %1381 = vmatpush2.msra.mxu0 0.0
        %1382 = vmatprep.subr.mxu0 0.0
        %1383 = vmatpush2.msra.mxu0 0.0
        %1384 = vmatprep.subr.mxu0 0.0
        %1385 = vmatpush2.msra.mxu0 0.0
        %1386 = vmatprep.subr.mxu0 0.0
        %1387 = vmatpush2.msra.mxu0 0.0
        %1388 = vmatprep.subr.mxu0 0.0
        %1389 = vmatpush2.msra.mxu0 0.0
        %1390 = vmatprep.subr.mxu0 0.0
        %1391 = vmatpush2.msra.mxu0 0.0
        %1392 = vmatprep.subr.mxu0 0.0
        %1393 = vmatpush2.msra.mxu0 0.0
        %1394 = vmatprep.subr.mxu0 0.0
        %1395 = vmatpush2.msra.mxu0 0.0
        %1396 = vmatprep.subr.mxu0 0.0
        %1397 = vmatpush2.msra.mxu0 0.0
        %1398 = vmatprep.mubr.f32.mxu0 0.0
        %1399 = vmatmul.mubr.f32.gmra.mxu0 %v1332
        %v1400 = vpop.f32.mrf.mxu0
        %v1401 = vadd.f32 0.0, %v1400
        %v1402 = vpop.f32.mrf.mxu0
        %1403 = vdwg.mxu0
        %v1404 = vcombine.low %v1182, %v1328
        %v1405 = vcombine.high %v1182, %v1328
        %v1407 = vunpack.c.l.s4 1983009808
        %v1408 = vunpack.c.0.s8 %v1407
        %v1409 = vlaneseq
        %v1410 = vshrl.u32 %v1409, 7
        %v1411 = vsub.s32 %v1408, %v1410
        %v1412 = vrot.slane %v1404, %v1411
        %v1414 = vunpack.c.l.s4 1983009808
        %v1415 = vunpack.c.0.s8 %v1414
        %v1416 = vlaneseq
        %v1417 = vshrl.u32 %v1416, 7
        %v1418 = vsub.s32 %v1415, %v1417
        %v1419 = vrot.slane %v1405, %v1418
        %v1420 = vcombine.low %v1255, %v1401
        %v1421 = vcombine.high %v1255, %v1401
        %v1423 = vunpack.c.l.s4 1983009808
        %v1424 = vunpack.c.0.s8 %v1423
        %v1425 = vlaneseq
        %v1426 = vshrl.u32 %v1425, 7
        %v1427 = vsub.s32 %v1424, %v1426
        %v1428 = vrot.slane %v1420, %v1427
        %v1430 = vunpack.c.l.s4 1983009808
        %v1431 = vunpack.c.0.s8 %v1430
        %v1432 = vlaneseq
        %v1433 = vshrl.u32 %v1432, 7
        %v1434 = vsub.s32 %v1431, %v1433
        %v1435 = vrot.slane %v1421, %v1434
        %v1436 = vcombine.low %v1412, %v1428
        %v1437 = vcombine.high %v1412, %v1428
        %v1439 = vunpack.c.l.s4 1934713408
        %v1440 = vunpack.c.0.s8 %v1439
        %v1441 = vlaneseq
        %v1442 = vshrl.u32 %v1441, 7
        %v1443 = vsub.s32 %v1440, %v1442
        %v1444 = vrot.slane %v1436, %v1443
        %v1446 = vunpack.c.l.s4 1934713408
        %v1447 = vunpack.c.0.s8 %v1446
        %v1448 = vlaneseq
        %v1449 = vshrl.u32 %v1448, 7
        %v1450 = vsub.s32 %v1447, %v1449
        %v1451 = vrot.slane %v1437, %v1450
        %v1452 = vcombine.low %v1419, %v1435
        %v1453 = vcombine.high %v1419, %v1435
        %v1455 = vunpack.c.l.s4 1934713408
        %v1456 = vunpack.c.0.s8 %v1455
        %v1457 = vlaneseq
        %v1458 = vshrl.u32 %v1457, 7
        %v1459 = vsub.s32 %v1456, %v1458
        %v1460 = vrot.slane %v1452, %v1459
        %v1462 = vunpack.c.l.s4 1934713408
        %v1463 = vunpack.c.0.s8 %v1462
        %v1464 = vlaneseq
        %v1465 = vshrl.u32 %v1464, 7
        %v1466 = vsub.s32 %v1463, %v1465
        %v1467 = vrot.slane %v1453, %v1466
        %v1468 = vcombine.high %v1444, 0.0
        %v1469 = vcombine.high %v1451, 0.0
        %v1470 = vcombine.high %v1460, 0.0
        %v1471 = vcombine.high %v1467, 0.0
        %v1472 = vcombine.low %v1444, %v1451
        %v1474 = vunpack.c.l.s4 1983009808
        %v1475 = vunpack.c.0.s8 %v1474
        %v1476 = vlaneseq
        %v1477 = vshrl.u32 %v1476, 7
        %v1478 = vsub.s32 %v1475, %v1477
        %v1479 = vrot.slane %v1472, %v1478
        %v1480 = vcombine.low %v1468, %v1469
        %v1482 = vunpack.c.l.s4 1983009808
        %v1483 = vunpack.c.0.s8 %v1482
        %v1484 = vlaneseq
        %v1485 = vshrl.u32 %v1484, 7
        %v1486 = vsub.s32 %v1483, %v1485
        %v1487 = vrot.slane %v1480, %v1486
        %v1488 = vcombine.low %v1460, %v1467
        %v1490 = vunpack.c.l.s4 1983009808
        %v1491 = vunpack.c.0.s8 %v1490
        %v1492 = vlaneseq
        %v1493 = vshrl.u32 %v1492, 7
        %v1494 = vsub.s32 %v1491, %v1493
        %v1495 = vrot.slane %v1488, %v1494
        %v1496 = vcombine.low %v1470, %v1471
        %v1498 = vunpack.c.l.s4 1983009808
        %v1499 = vunpack.c.0.s8 %v1498
        %v1500 = vlaneseq
        %v1501 = vshrl.u32 %v1500, 7
        %v1502 = vsub.s32 %v1499, %v1501
        %v1503 = vrot.slane %v1496, %v1502
        %v1504 = vcombine.low %v1479, %v1487
        %v1505 = vcombine.high %v1479, %v1487
        %v1507 = vunpack.c.l.s4 1934713408
        %v1508 = vunpack.c.0.s8 %v1507
        %v1509 = vlaneseq
        %v1510 = vshrl.u32 %v1509, 7
        %v1511 = vsub.s32 %v1508, %v1510
        %v1512 = vrot.slane %v1504, %v1511
        %v1514 = vunpack.c.l.s4 1934713408
        %v1515 = vunpack.c.0.s8 %v1514
        %v1516 = vlaneseq
        %v1517 = vshrl.u32 %v1516, 7
        %v1518 = vsub.s32 %v1515, %v1517
        %v1519 = vrot.slane %v1505, %v1518
        %v1520 = vcombine.low %v1495, %v1503
        %v1521 = vcombine.high %v1495, %v1503
        %v1523 = vunpack.c.l.s4 1934713408
        %v1524 = vunpack.c.0.s8 %v1523
        %v1525 = vlaneseq
        %v1526 = vshrl.u32 %v1525, 7
        %v1527 = vsub.s32 %v1524, %v1526
        %v1528 = vrot.slane %v1520, %v1527
        %v1530 = vunpack.c.l.s4 1934713408
        %v1531 = vunpack.c.0.s8 %v1530
        %v1532 = vlaneseq
        %v1533 = vshrl.u32 %v1532, 7
        %v1534 = vsub.s32 %v1531, %v1533
        %v1535 = vrot.slane %v1521, %v1534
        %v1536 = vcombine.low %v1512, %v1528
        %v1537 = vcombine.high %v1512, %v1528
        %v1538 = vcombine.low %v1519, %v1535
        %v1539 = vcombine.high %v1519, %v1535
        %1541 = vrot.lane.b32.xlu0 %v1537, 8
        %v1542 = vpop.permute.xlu0 %1541
        %1545 = vrot.lane.b32.xlu0 %v1538, 16
        %v1546 = vpop.permute.xlu0 %1545
        %1549 = vrot.lane.b32.xlu0 %v1539, 24
        %v1550 = vpop.permute.xlu0 %1549
        %v1552 = vsel %vm763, %v1536, %v1542
        %vm1553 = vcmask 130048
        %v1554 = vsel %vm1553, %v1552, %v1546
        %vm1555 = vcmask 195584
        %v1556 = vsel %vm1555, %v1554, %v1550
        %v1557 = vld [vmem:[#allocation7] sm:$0xff]
        %v1558 = vld [vmem:[#allocation7 + $0x8] sm:$0xff]
        %v1559 = vld [vmem:[#allocation7 + $0x10] sm:$0xff]
        %v1560 = vld [vmem:[#allocation7 + $0x18] sm:$0xff]
        %v1561 = vld [vmem:[%s3] sm:$0x1]
        %v1563 = vlaneseq
        %v1564 = vshrl.u32 %v1563, 7
        %v1565 = vsub.s32 0, %v1564
        %v1566 = vrot.slane %v1561, %v1565
        %v1569 = vsel %vm247, %v1556, 0
        %1571 = vmatprep.subr.mxu0 0.0
        %1572 = vmatpush1.msra.mxu0 0.0
        %1573 = vmatprep.subr.mxu0 0.0
        %1574 = vmatpush1.msra.mxu0 0.0
        %1575 = vmatprep.subr.mxu0 0.0
        %1576 = vmatpush1.msra.mxu0 0.0
        %1577 = vmatprep.subr.mxu0 0.0
        %1578 = vmatpush1.msra.mxu0 0.0
        %1579 = vmatprep.subr.mxu0 0.0
        %1580 = vmatpush1.msra.mxu0 0.0
        %1581 = vmatprep.subr.mxu0 0.0
        %1582 = vmatpush1.msra.mxu0 0.0
        %1583 = vmatprep.subr.mxu0 0.0
        %1584 = vmatpush1.msra.mxu0 0.0
        %1585 = vmatprep.subr.mxu0 0.0
        %1586 = vmatpush1.msra.mxu0 0.0
        %1587 = vmatprep.subr.mxu0 0.0
        %1588 = vmatpush1.msra.mxu0 0.0
        %1589 = vmatprep.subr.mxu0 0.0
        %1590 = vmatpush1.msra.mxu0 0.0
        %1591 = vmatprep.subr.mxu0 0.0
        %1592 = vmatpush1.msra.mxu0 0.0
        %1593 = vmatprep.subr.mxu0 0.0
        %1594 = vmatpush1.msra.mxu0 0.0
        %1595 = vmatprep.subr.mxu0 0.0
        %1596 = vmatpush1.msra.mxu0 %v1560
        %1597 = vmatprep.subr.mxu0 0.0
        %1598 = vmatpush1.msra.mxu0 %v1559
        %1599 = vmatprep.subr.mxu0 0.0
        %1600 = vmatpush1.msra.mxu0 %v1558
        %1601 = vmatprep.subr.mxu0 0.0
        %1602 = vmatpush1.msra.mxu0 %v1557
        %1603 = vmatprep.subr.mxu0 0.0
        %1604 = vmatpush2.msra.mxu0 0.0
        %1605 = vmatprep.subr.mxu0 0.0
        %1606 = vmatpush2.msra.mxu0 0.0
        %1607 = vmatprep.subr.mxu0 0.0
        %1608 = vmatpush2.msra.mxu0 0.0
        %1609 = vmatprep.subr.mxu0 0.0
        %1610 = vmatpush2.msra.mxu0 0.0
        %1611 = vmatprep.subr.mxu0 0.0
        %1612 = vmatpush2.msra.mxu0 0.0
        %1613 = vmatprep.subr.mxu0 0.0
        %1614 = vmatpush2.msra.mxu0 0.0
        %1615 = vmatprep.subr.mxu0 0.0
        %1616 = vmatpush2.msra.mxu0 0.0
        %1617 = vmatprep.subr.mxu0 0.0
        %1618 = vmatpush2.msra.mxu0 0.0
        %1619 = vmatprep.subr.mxu0 0.0
        %1620 = vmatpush2.msra.mxu0 0.0
        %1621 = vmatprep.subr.mxu0 0.0
        %1622 = vmatpush2.msra.mxu0 0.0
        %1623 = vmatprep.subr.mxu0 0.0
        %1624 = vmatpush2.msra.mxu0 0.0
        %1625 = vmatprep.subr.mxu0 0.0
        %1626 = vmatpush2.msra.mxu0 0.0
        %1627 = vmatprep.subr.mxu0 0.0
        %1628 = vmatpush2.msra.mxu0 0.0
        %1629 = vmatprep.subr.mxu0 0.0
        %1630 = vmatpush2.msra.mxu0 0.0
        %1631 = vmatprep.subr.mxu0 0.0
        %1632 = vmatpush2.msra.mxu0 0.0
        %1633 = vmatprep.subr.mxu0 0.0
        %1634 = vmatpush2.msra.mxu0 0.0
        %1635 = vmatprep.mubr.f32.mxu0 0.0
        %1636 = vmatmul.mubr.f32.gmra.mxu0 %v1569
        %v1637 = vpop.f32.mrf.mxu0
        %v1638 = vadd.f32 %v1566, %v1637
        %v1639 = vpop.f32.mrf.mxu0
        %1640 = vdwg.mxu0
        %1641 = vst.msk [vmem:[%s241] sm:$0xff] %vm247, %v1638
        %s1642 = sand.u32 %s119, 1
        %s1643 = scalar_lea.sflag [#allocation4], %s1642
        %s1644 = sand.u32 %s119, 1
        %s1645 = smul.addr %s1644, 8
        %s1646 = scalar_lea.vmem [#allocation8], %s1645
        // Predicated region
        $region49: #{tpu_custom_call.1} parent=35 // pred_check
          %p1647 = pneg %p129
        $region50: #{tpu_custom_call.1} parent=35 // pred_check_branch
          %1649 = sbr.rel (%p1647) target = $region52
        $region51: #{tpu_custom_call.1} parent=35 // pred_region
          %s1651 = ssub.s32 128, 128
          %1652 = vsyncadd %s1643, %s1651
          %s1653 = smul.addr %s22, 128
          %s1654 = scalar_lea.hbm %s4, %s1653
          %s1656 = sshll.u32 %s1646, 4
          %s1657 = int_to_ptr.vmem [resolvable:$true] %s1656
          %1659 = dma.vmem_to_hbm [thread:$0]  %s1657, 128, %s1654, %s1643
        $region52: #{tpu_custom_call.1} parent=35 // pred_fallthru
          _
      $region36: #{tpu_custom_call.1} parent=5 // pred_fallthru
        _
      %p1660 = scmp.le.s32.totalorder 2, %s17
      // Predicated region
      $region53: #{tpu_custom_call.1} parent=5 // pred_check
        %p1661 = pneg %p1660
      $region54: #{tpu_custom_call.1} parent=5 // pred_check_branch
        %1663 = sbr.rel (%p1661) target = $region56
      $region55: #{tpu_custom_call.1} parent=5 // pred_region
        %s1664 = ssub.s32 %s17, 2
        // Predicated region
        $region57: #{tpu_custom_call.1} parent=55 // pred_check
          %p1665 = pneg %p135
        $region58: #{tpu_custom_call.1} parent=55 // pred_check_branch
          %1667 = sbr.rel (%p1665) target = $region60
        $region59: #{tpu_custom_call.1} parent=55 // pred_region
          %s1668 = sand.u32 %s120, 1
          %s1669 = scalar_lea.sflag [#allocation4], %s1668
          %s1670 = sand.u32 %s120, 1
          %s1671 = smul.addr %s1670, 8
          %s1672 = scalar_lea.vmem [#allocation8], %s1671
          %1673 = dma.done %s1669, 128
        $region60: #{tpu_custom_call.1} parent=55 // pred_fallthru
          _
      $region56: #{tpu_custom_call.1} parent=5 // pred_fallthru
        _
    $region6: #{tpu_custom_call.1} parent=1 // loop_footer
      %s21 = sadd.s32 1, %s17
    $region7: #{tpu_custom_call.1} parent=1 // loop_footer_branch
      %16 = sbr.rel target = $region3
    $region8: #{tpu_custom_call.1} parent=1 // loop_exit
      _
    %1674 = vsyncpa [#allocation3], 1
    %s1675 = scalar_lea.sflag [#allocation3], 1
    %1676 = vsyncpa %s1675, 1
    %1677 = vsyncpa [#allocation6], 1
    %1678 = vsyncpa [#allocation4], 1
    %s1679 = scalar_lea.sflag [#allocation4], 1
    %1680 = vsyncpa %s1679, 1

</llo_original>
